<compile_context>
chip_gen: v6e
topology: v6e:2x2x1
jax: 0.10.0
libtpu: 0.0.40
codegen_flags: <defaults>
</compile_context>

<pallas_src>
import functools

import jax
import jax.numpy as jnp
from jax.experimental import pallas as pl
from jax.experimental.pallas import tpu as pltpu

EPS_BN = 1e-5       # nn.BatchNorm1d default eps
EPS_NORM = 1e-12    # F.normalize default eps


# ---------------------------------------------------------------------------
# Kernel 1: fused encoder (q + k branches) -> projector MLP -> F.normalize
#           also emits bf16 q and the positive logit l_pos = <q,k>/T
# ---------------------------------------------------------------------------
def _encoder_kernel(x_ref, we_ref, be_ref, w1_ref, g_ref, b_ref, w2_ref,
                    b2_ref, z_ref, qb_ref, lpos_ref, *, batch, inv_t):
    # TODO(synk): ViT1D is not defined in the reference source; a linear patch
    # embedding is a deterministic stand-in for the frontend.
    # AdaptiveAvgPool1d(1) commutes with this *linear* embedding, so pool the
    # S patches per sample first, then one small (2B,P)@(P,D) matmul
    # (S-fold fewer MXU FLOPs, no (2B*S, D) intermediate).
    xm = jnp.mean(x_ref[...], axis=1)                                    # (2B, P)

    # bf16 MXU operands, f32 accumulation; elementwise math stays f32.
    emb = jnp.dot(xm.astype(jnp.bfloat16), we_ref[...].astype(jnp.bfloat16),
                  preferred_element_type=jnp.float32) + be_ref[...]      # (2B, D)
    h = jnp.dot(emb.astype(jnp.bfloat16), w1_ref[...].astype(jnp.bfloat16),
                preferred_element_type=jnp.float32)                      # (2B, H)

    # Training-mode (biased-variance) BatchNorm statistics, PER BRANCH so the
    # fused call matches two independent encoder passes (valid while q/k
    # params are identical, i.e. momentum update is a no-op).
    hq = h[:batch]
    hk = h[batch:]
    mu_q = jnp.mean(hq, axis=0, keepdims=True)
    mu_k = jnp.mean(hk, axis=0, keepdims=True)
    var_q = jnp.mean((hq - mu_q) ** 2, axis=0, keepdims=True)
    var_k = jnp.mean((hk - mu_k) ** 2, axis=0, keepdims=True)
    row = jax.lax.broadcasted_iota(jnp.int32, (2 * batch, 1), 0)
    is_k = row >= batch
    mu = jnp.where(is_k, mu_k, mu_q)
    var = jnp.where(is_k, var_k, var_q)

    hn = (h - mu) * jax.lax.rsqrt(var + EPS_BN) * g_ref[...] + b_ref[...]
    r = jnp.maximum(hn, 0.0)
    z = jnp.dot(r.astype(jnp.bfloat16), w2_ref[...].astype(jnp.bfloat16),
                preferred_element_type=jnp.float32) + b2_ref[...]        # (2B, E)

    # F.normalize(z, dim=1) == z * rsqrt(max(sum(z^2), eps^2))  (rsqrt -> EUP)
    ssq = jnp.sum(z * z, axis=1, keepdims=True)
    zn = z * jax.lax.rsqrt(jnp.maximum(ssq, EPS_NORM * EPS_NORM))
    z_ref[...] = zn

    q = zn[:batch]
    k = zn[batch:]
    # q is cast to bf16 ONCE here (the head's MXU consumes it directly).
    qb_ref[...] = q.astype(jnp.bfloat16)
    # Positive logit, computed once while q and k are both resident.
    lpos_ref[...] = jnp.sum(q * k, axis=1, keepdims=True) * inv_t


def encoder_forward(x, params, *, batch, inv_t):
    E = params["w2"].shape[1]
    vm = pl.BlockSpec(memory_space=pltpu.MemorySpace.VMEM)
    # TODO(synk): at production B*S this un-gridded call should get a grid over
    # the patch-row axis (pooled-sum accumulator in VMEM scratch) to bound VMEM
    # (v7x has only 64 MiB) and enable DMA/compute overlap.
    return pl.pallas_call(
        functools.partial(_encoder_kernel, batch=batch, inv_t=inv_t),
        out_shape=(jax.ShapeDtypeStruct((2 * batch, E), jnp.float32),   # z (q|k)
                   jax.ShapeDtypeStruct((batch, E), jnp.bfloat16),      # q bf16
                   jax.ShapeDtypeStruct((batch, 1), jnp.float32)),      # l_pos
        in_specs=[vm] * 8,
        out_specs=(vm, vm, vm),
    )(x, params["we"], params["be"], params["w1"],
      params["gamma"], params["beta"], params["w2"], params["b2"])


# ---------------------------------------------------------------------------
# Kernel 2: MoCo negatives head, tiled over K, online logsumexp (per split)
# ---------------------------------------------------------------------------
def _make_head_kernel(emit_lneg, inv_t):
    def kernel(qb_ref, queue_ref, *refs):
        if emit_lneg:
            lneg_ref, lse_ref, m_sc, l_sc = refs
        else:
            lneg_ref = None
            lse_ref, m_sc, l_sc = refs
        j = pl.program_id(1)

        @pl.when(j == 0)
        def _():
            m_sc[...] = jnp.full_like(m_sc, -jnp.inf)
            l_sc[...] = jnp.zeros_like(l_sc)

        # bf16 q (pre-cast in the encoder) x bf16 queue tile, f32 accumulation.
        # Elementwise softmax/LSE math stays on the f32 `s` tensor.
        s = jnp.dot(qb_ref[...], queue_ref[...],
                    preferred_element_type=jnp.float32) * inv_t          # (B, TK)
        if emit_lneg:
            lneg_ref[...] = s                                            # lane-dense store

        m_new = jnp.maximum(m_sc[...], jnp.max(s, axis=1, keepdims=True))
        l_sc[...] = (l_sc[...] * jnp.exp(m_sc[...] - m_new)
                     + jnp.sum(jnp.exp(s - m_new), axis=1, keepdims=True))
        m_sc[...] = m_new

        @pl.when(j == pl.num_programs(1) - 1)
        def _():
            lse_ref[0] = m_sc[...] + jnp.log(l_sc[...])                  # partial LSE
    return kernel


def moco_head(q_bf16, queue_bf16, temperature, *, block_k=None, num_splits=1,
              return_lneg=False):
    B, E = q_bf16.shape
    _, K = queue_bf16.shape
    assert K % num_splits == 0
    kp = K // num_splits
    if block_k is None:
        # Largest tile dividing the per-split extent: a (128, 16384) bf16 queue
        # tile is 4 MiB (8 MiB double-buffered) — cheap even on v7x — and cuts
        # per-grid-step overhead 8x vs 2048-wide tiles.
        block_k = kp
        for cand in (16384, 8192, 4096, 2048, 1024, 512, 256, 128):
            if kp % cand == 0:
                block_k = cand
                break
    assert kp % block_k == 0
    nk = kp // block_k

    lse_spec = pl.BlockSpec((1, B, 1), lambda p, j: (p, 0, 0))
    lse_shape = jax.ShapeDtypeStruct((num_splits, B, 1), jnp.float32)
    if return_lneg:
        out_specs = (pl.BlockSpec((B, block_k), lambda p, j: (0, p * nk + j)),
                     lse_spec)
        out_shape = (jax.ShapeDtypeStruct((B, K), jnp.float32), lse_shape)
    else:
        # Loss-only path: the (B, K) l_neg writeback (dominant HBM stream at
        # production batch sizes) is dropped entirely.
        out_specs = lse_spec
        out_shape = lse_shape

    result = pl.pallas_call(
        _make_head_kernel(return_lneg, 1.0 / temperature),
        grid=(num_splits, nk),
        in_specs=[
            pl.BlockSpec((B, E), lambda p, j: (0, 0)),            # q (resident)
            # TODO(synk): if profiling shows exposed queue DMA at large block_k
            # add pipeline_mode=pl.Buffered(3) here; on v7x the queue could be
            # stored fp8 (int8 on v6e) with per-column scales for 2x less HBM.
            pl.BlockSpec((E, block_k), lambda p, j: (0, p * nk + j)),
        ],
        out_specs=out_specs,
        out_shape=out_shape,
        scratch_shapes=[pltpu.VMEM((B, 1), jnp.float32),   # running max m_i
                        pltpu.VMEM((B, 1), jnp.float32)],  # running sum l_i
        compiler_params=pltpu.CompilerParams(
            # Leading split axis is 'parallel' so v7x's two TensorCores each
            # take half of K (no effect on 1-TC v5e/v6e); the K-tile axis is
            # the online-LSE reduction -> 'arbitrary'.
            dimension_semantics=("parallel", "arbitrary"),
            vmem_limit_bytes=48 * 1024 * 1024),
    )(q_bf16, queue_bf16)

    if return_lneg:
        l_neg, lse_parts = result
    else:
        l_neg, lse_parts = None, result
    return l_neg, lse_parts


# ---------------------------------------------------------------------------
# CustomMoCo.forward: loss = CE(training_step(img_1, img_2), labels=0)
#                          = mean( logsumexp(logits, 1) - l_pos )
# ---------------------------------------------------------------------------
def custom_moco_forward(params, queue_bf16, queue_ptr, img_q, img_k, *,
                        patch=16, temperature=0.07, num_core_splits=1,
                        return_logits=False):
    B, _, L = img_q.shape          # NCL, C == 1
    S = L // patch
    K = queue_bf16.shape[1]
    assert K % B == 0              # reference MoCo requirement (no queue wrap)

    # Row-major 1-D patches; q and k branches stacked for one fused encoder pass.
    x = jnp.concatenate([img_q.reshape(B, S, patch),
                         img_k.reshape(B, S, patch)], axis=0).astype(jnp.float32)

    # encoder_q and encoder_k share identical params (momentum update no-op).
    z, q_bf16, l_pos = encoder_forward(x, params, batch=B,
                                       inv_t=1.0 / temperature)
    k = z[B:]                      # key embeddings (no_grad branch)

    l_neg, lse_parts = moco_head(q_bf16, queue_bf16, temperature,
                                 num_splits=num_core_splits,
                                 return_lneg=return_logits)

    # Combine per-split negative LSE partials with the positive logit.
    lse_neg = jax.nn.logsumexp(lse_parts[:, :, 0], axis=0)[:, None]      # (B, 1)
    lse = jnp.logaddexp(lse_neg, l_pos)
    loss = jnp.mean(lse - l_pos)

    # _dequeue_and_enqueue (non-wrapping branch, K % B == 0). In production,
    # donate the queue under jit for an in-place B-column write.
    new_queue = jax.lax.dynamic_update_slice(
        queue_bf16, k.astype(queue_bf16.dtype).T, (jnp.int32(0), queue_ptr))
    new_ptr = (queue_ptr + B) % K
    return loss, l_pos, l_neg, new_queue, new_ptr


if __name__ == "__main__":
    key = jax.random.PRNGKey(0)
    B, L, PATCH = 4, 128, 16          # small batch, 1-D signal length, patch size
    D, H, E = 256, 512, 128           # vit dim, projector hidden, emb_dim
    K = 1024                          # num_negatives (reduced from 65536 for test)

    ks = jax.random.split(key, 6)
    params = {
        "we": jax.random.normal(ks[0], (PATCH, D), jnp.float32) * 0.05,
        "be": jnp.zeros((1, D), jnp.float32),
        "w1": jax.random.normal(ks[1], (D, H), jnp.float32) * 0.05,
        "gamma": jnp.ones((1, H), jnp.float32),    # BatchNorm1d affine init
        "beta": jnp.zeros((1, H), jnp.float32),
        "w2": jax.random.normal(ks[2], (H, E), jnp.float32) * 0.05,
        "b2": jnp.zeros((1, E), jnp.float32),
    }
    queue = jax.random.normal(ks[3], (E, K), jnp.float32)
    queue = queue / jnp.linalg.norm(queue, axis=0, keepdims=True)  # normalize(dim=0)
    queue = queue.astype(jnp.bfloat16)   # carried bf16 (f32 accumulation in-kernel)
    queue_ptr = jnp.array(0, jnp.int32)

    img_1 = jax.random.normal(ks[4], (B, 1, L), jnp.float32)
    img_2 = jax.random.normal(ks[5], (B, 1, L), jnp.float32)

    base = functools.partial(custom_moco_forward, patch=PATCH, temperature=0.07)
    fwd_loss = jax.jit(functools.partial(base, return_logits=False))
    fwd_logits = jax.jit(functools.partial(base, return_logits=True))
    fwd_split = jax.jit(functools.partial(base, return_logits=False,
                                          num_core_splits=2))   # v7x dual-TC path

    # Production loss-only path (l_neg writeback dropped).
    loss, l_pos, l_neg, new_q, new_ptr = fwd_loss(params, queue, queue_ptr,
                                                  img_1, img_2)
    jax.block_until_ready((loss, l_pos, new_q, new_ptr))
    assert l_neg is None

    # Logits path (for validation / when logits are actually consumed).
    loss2, l_pos2, l_neg2, _, _ = fwd_logits(params, queue, queue_ptr,
                                             img_1, img_2)
    jax.block_until_ready((loss2, l_pos2, l_neg2))

    # Two-way K split (runs serially on 1-TC chips, across cores on v7x).
    loss3, *_ = fwd_split(params, queue, queue_ptr, img_1, img_2)
    jax.block_until_ready(loss3)

    assert l_pos.shape == (B, 1)
    assert l_neg2.shape == (B, K)
    assert new_q.shape == (E, K)
    assert int(new_ptr) == B % K
    assert bool(jnp.isfinite(loss))

    # Online-LSE loss must match the loss recomputed from the emitted logits.
    logits = jnp.concatenate([l_pos2, l_neg2], axis=1)
    loss_ref = jnp.mean(jax.nn.logsumexp(logits, axis=1, keepdims=True) - l_pos2)
    assert bool(jnp.allclose(loss2, loss_ref, atol=1e-3, rtol=1e-3))
    assert bool(jnp.allclose(loss, loss2, atol=1e-5, rtol=1e-5))
    assert bool(jnp.allclose(loss, loss3, atol=1e-4, rtol=1e-4))
    print("KERNEL_OK")
</pallas_src>

<mosaic_0001>
module attributes {stable_mosaic.version = 11 : i64} {
  func.func @kernel(%arg0: i32, %arg1: i32, %arg2: memref<4x128xbf16, #tpu.memory_space<vmem>>, %arg3: memref<128x1024xbf16, #tpu.memory_space<vmem>>, %arg4: memref<1x4x1xf32, #tpu.memory_space<vmem>>, %arg5: memref<4x1xf32, #tpu.memory_space<vmem>>, %arg6: memref<4x1xf32, #tpu.memory_space<vmem>>) attributes {dimension_semantics = [#tpu.dimension_semantics<parallel>, #tpu.dimension_semantics<arbitrary>], iteration_bounds = array<i64: 1, 1>, scalar_prefetch = 0 : i64, scratch_operands = 2 : i64, tpu.core_type = #tpu.core_type<tc>, window_params = [{pipeline_mode = #tpu.pipeline_mode<synchronous>, transform_indices = @transform_0, window_bounds = array<i64: 4, 128>}, {transform_indices = @transform_1, window_bounds = array<i64: 128, 1024>}, {transform_indices = @transform_2, window_bounds = array<i64: 1, 4, 1>}]} {
    %c0_i32 = arith.constant 0 : i32
    %0 = arith.cmpi eq, %arg1, %c0_i32 : i32
    %1 = arith.extui %0 : i1 to i32
    %c0_i32_0 = arith.constant 0 : i32
    %2 = arith.cmpi ne, %1, %c0_i32_0 : i32
    scf.if %2 {
      %cst_19 = arith.constant 0xFF800000 : f32
      %28 = vector.broadcast %cst_19 : f32 to vector<4x1xf32>
      %c0_20 = arith.constant 0 : index
      %c0_21 = arith.constant 0 : index
      %29 = vector.load %arg5[%c0_20, %c0_21] : memref<4x1xf32, #tpu.memory_space<vmem>>, vector<4x1xf32>
      tpu.vector_store %arg5[%c0_20, %c0_21], %28 {strides = array<i32>} : memref<4x1xf32, #tpu.memory_space<vmem>>, vector<4x1xf32>,
      %cst_22 = arith.constant 0.000000e+00 : f32
      %30 = vector.broadcast %cst_22 : f32 to vector<4x1xf32>
      %c0_23 = arith.constant 0 : index
      %c0_24 = arith.constant 0 : index
      %31 = vector.load %arg6[%c0_23, %c0_24] : memref<4x1xf32, #tpu.memory_space<vmem>>, vector<4x1xf32>
      tpu.vector_store %arg6[%c0_23, %c0_24], %30 {strides = array<i32>} : memref<4x1xf32, #tpu.memory_space<vmem>>, vector<4x1xf32>,
    } else {
    }
    %c0 = arith.constant 0 : index
    %c0_1 = arith.constant 0 : index
    %3 = vector.load %arg2[%c0, %c0_1] : memref<4x128xbf16, #tpu.memory_space<vmem>>, vector<4x128xbf16>
    %c0_2 = arith.constant 0 : index
    %c0_3 = arith.constant 0 : index
    %4 = vector.load %arg3[%c0_2, %c0_3] : memref<128x1024xbf16, #tpu.memory_space<vmem>>, vector<128x1024xbf16>
    %cst = arith.constant dense<0.000000e+00> : vector<4x1024xf32>
    %5 = tpu.matmul %3, %4, %cst {dimension_numbers = #tpu.dot_dimension_numbers<[1], [0], [0], [1], [0, 0, 1, 1], [], []>} : vector<4x128xbf16>, vector<128x1024xbf16>, vector<4x1024xf32> -> vector<4x1024xf32>
    %cst_4 = arith.constant 14.2857141 : f32
    %6 = vector.broadcast %cst_4 : f32 to vector<4x1024xf32>
    %7 = arith.mulf %5, %6 : vector<4x1024xf32>
    %c0_5 = arith.constant 0 : index
    %c0_6 = arith.constant 0 : index
    %8 = vector.load %arg5[%c0_5, %c0_6] : memref<4x1xf32, #tpu.memory_space<vmem>>, vector<4x1xf32>
    %cst_7 = arith.constant dense<0xFF800000> : vector<4xf32>
    %9 = vector.multi_reduction <maximumf>, %7, %cst_7 [1] : vector<4x1024xf32> to vector<4xf32>
    %10 = vector.shape_cast %9 : vector<4xf32> to vector<4x1xf32>
    %11 = arith.maximumf %8, %10 : vector<4x1xf32>
    %c0_8 = arith.constant 0 : index
    %c0_9 = arith.constant 0 : index
    %12 = vector.load %arg6[%c0_8, %c0_9] : memref<4x1xf32, #tpu.memory_space<vmem>>, vector<4x1xf32>
    %c0_10 = arith.constant 0 : index
    %c0_11 = arith.constant 0 : index
    %13 = vector.load %arg5[%c0_10, %c0_11] : memref<4x1xf32, #tpu.memory_space<vmem>>, vector<4x1xf32>
    %14 = arith.subf %13, %11 : vector<4x1xf32>
    %15 = math.exp %14 : vector<4x1xf32>
    %16 = arith.mulf %12, %15 : vector<4x1xf32>
    %17 = vector.broadcast %11 : vector<4x1xf32> to vector<4x1024xf32>
    %18 = arith.subf %7, %17 : vector<4x1024xf32>
    %19 = math.exp %18 : vector<4x1024xf32>
    %cst_12 = arith.constant dense<0.000000e+00> : vector<4xf32>
    %20 = vector.multi_reduction <add>, %19, %cst_12 [1] : vector<4x1024xf32> to vector<4xf32>
    %21 = vector.shape_cast %20 : vector<4xf32> to vector<4x1xf32>
    %22 = arith.addf %16, %21 : vector<4x1xf32>
    %c0_13 = arith.constant 0 : index
    %c0_14 = arith.constant 0 : index
    %23 = vector.load %arg6[%c0_13, %c0_14] : memref<4x1xf32, #tpu.memory_space<vmem>>, vector<4x1xf32>
    tpu.vector_store %arg6[%c0_13, %c0_14], %22 {strides = array<i32>} : memref<4x1xf32, #tpu.memory_space<vmem>>, vector<4x1xf32>,
    %c0_15 = arith.constant 0 : index
    %c0_16 = arith.constant 0 : index
    %24 = vector.load %arg5[%c0_15, %c0_16] : memref<4x1xf32, #tpu.memory_space<vmem>>, vector<4x1xf32>
    tpu.vector_store %arg5[%c0_15, %c0_16], %11 {strides = array<i32>} : memref<4x1xf32, #tpu.memory_space<vmem>>, vector<4x1xf32>,
    %c0_i32_17 = arith.constant 0 : i32
    %25 = arith.cmpi eq, %arg1, %c0_i32_17 : i32
    %26 = arith.extui %25 : i1 to i32
    %c0_i32_18 = arith.constant 0 : i32
    %27 = arith.cmpi ne, %26, %c0_i32_18 : i32
    scf.if %27 {
      %c0_19 = arith.constant 0 : index
      %c0_20 = arith.constant 0 : index
      %28 = vector.load %arg5[%c0_19, %c0_20] : memref<4x1xf32, #tpu.memory_space<vmem>>, vector<4x1xf32>
      %c0_21 = arith.constant 0 : index
      %c0_22 = arith.constant 0 : index
      %29 = vector.load %arg6[%c0_21, %c0_22] : memref<4x1xf32, #tpu.memory_space<vmem>>, vector<4x1xf32>
      %30 = math.log %29 : vector<4x1xf32>
      %31 = arith.addf %28, %30 : vector<4x1xf32>
      %c0_23 = arith.constant 0 : index
      %c0_24 = arith.constant 0 : index
      %c0_25 = arith.constant 0 : index
      %32 = vector.load %arg4[%c0_23, %c0_24, %c0_25] : memref<1x4x1xf32, #tpu.memory_space<vmem>>, vector<1x4x1xf32>
      %33 = vector.shape_cast %32 : vector<1x4x1xf32> to vector<4x1xf32>
      %34 = vector.shape_cast %31 : vector<4x1xf32> to vector<1x4x1xf32>
      tpu.vector_store %arg4[%c0_23, %c0_24, %c0_25], %34 {strides = array<i32>} : memref<1x4x1xf32, #tpu.memory_space<vmem>>, vector<1x4x1xf32>,
    } else {
    }
    return
  }
  func.func @transform_0(%arg0: i32, %arg1: i32) -> (i32, i32) {
    %c0_i32 = arith.constant 0 : i32
    %c0_i32_0 = arith.constant 0 : i32
    %c0_i32_1 = arith.constant 0 : i32
    return %c0_i32, %c0_i32_0 : i32, i32
  }
  func.func @transform_1(%arg0: i32, %arg1: i32) -> (i32, i32) {
    %c1_i32 = arith.constant 1 : i32
    %0 = arith.muli %arg0, %c1_i32 : i32
    %1 = arith.addi %0, %arg1 : i32
    %c0_i32 = arith.constant 0 : i32
    %c0_i32_0 = arith.constant 0 : i32
    return %c0_i32, %1 : i32, i32
  }
  func.func @transform_2(%arg0: i32, %arg1: i32) -> (i32, i32, i32) {
    %c0_i32 = arith.constant 0 : i32
    %c0_i32_0 = arith.constant 0 : i32
    %c0_i32_1 = arith.constant 0 : i32
    return %arg0, %c0_i32, %c0_i32_0 : i32, i32, i32
  }
}

module attributes {stable_mosaic.version = 11 : i64} {
  func.func @_encoder_kernel(%arg0: memref<8x8x16xf32, #tpu.memory_space<vmem>>, %arg1: memref<16x256xf32, #tpu.memory_space<vmem>>, %arg2: memref<1x256xf32, #tpu.memory_space<vmem>>, %arg3: memref<256x512xf32, #tpu.memory_space<vmem>>, %arg4: memref<1x512xf32, #tpu.memory_space<vmem>>, %arg5: memref<1x512xf32, #tpu.memory_space<vmem>>, %arg6: memref<512x128xf32, #tpu.memory_space<vmem>>, %arg7: memref<1x128xf32, #tpu.memory_space<vmem>>, %arg8: memref<8x128xf32, #tpu.memory_space<vmem>>, %arg9: memref<4x128xbf16, #tpu.memory_space<vmem>>, %arg10: memref<4x1xf32, #tpu.memory_space<vmem>>) attributes {dimension_semantics = [], scalar_prefetch = 0 : i64, scratch_operands = 0 : i64, tpu.core_type = #tpu.core_type<tc>} {
    %c0 = arith.constant 0 : index
    %c0_0 = arith.constant 0 : index
    %c0_1 = arith.constant 0 : index
    %0 = vector.load %arg0[%c0, %c0_0, %c0_1] : memref<8x8x16xf32, #tpu.memory_space<vmem>>, vector<8x8x16xf32>
    %cst = arith.constant dense<0.000000e+00> : vector<8x16xf32>
    %1 = vector.multi_reduction <add>, %0, %cst [1] : vector<8x8x16xf32> to vector<8x16xf32>
    %cst_2 = arith.constant 8.000000e+00 : f32
    %2 = vector.broadcast %cst_2 : f32 to vector<8x16xf32>
    %3 = arith.divf %1, %2 : vector<8x16xf32>
    %4 = arith.truncf %3 : vector<8x16xf32> to vector<8x16xbf16>
    %c0_3 = arith.constant 0 : index
    %c0_4 = arith.constant 0 : index
    %5 = vector.load %arg1[%c0_3, %c0_4] : memref<16x256xf32, #tpu.memory_space<vmem>>, vector<16x256xf32>
    %6 = arith.truncf %5 : vector<16x256xf32> to vector<16x256xbf16>
    %cst_5 = arith.constant dense<0.000000e+00> : vector<8x256xf32>
    %7 = tpu.matmul %4, %6, %cst_5 {dimension_numbers = #tpu.dot_dimension_numbers<[1], [0], [0], [1], [0, 0, 1, 1], [], []>} : vector<8x16xbf16>, vector<16x256xbf16>, vector<8x256xf32> -> vector<8x256xf32>
    %c0_6 = arith.constant 0 : index
    %c0_7 = arith.constant 0 : index
    %8 = vector.load %arg2[%c0_6, %c0_7] : memref<1x256xf32, #tpu.memory_space<vmem>>, vector<1x256xf32>
    %9 = vector.broadcast %8 : vector<1x256xf32> to vector<8x256xf32>
    %10 = arith.addf %7, %9 : vector<8x256xf32>
    %11 = arith.truncf %10 : vector<8x256xf32> to vector<8x256xbf16>
    %c0_8 = arith.constant 0 : index
    %c0_9 = arith.constant 0 : index
    %12 = vector.load %arg3[%c0_8, %c0_9] : memref<256x512xf32, #tpu.memory_space<vmem>>, vector<256x512xf32>
    %13 = arith.truncf %12 : vector<256x512xf32> to vector<256x512xbf16>
    %cst_10 = arith.constant dense<0.000000e+00> : vector<8x512xf32>
    %14 = tpu.matmul %11, %13, %cst_10 {dimension_numbers = #tpu.dot_dimension_numbers<[1], [0], [0], [1], [0, 0, 1, 1], [], []>} : vector<8x256xbf16>, vector<256x512xbf16>, vector<8x512xf32> -> vector<8x512xf32>
    %15 = vector.extract_strided_slice %14 {offsets = [0, 0], sizes = [4, 512], strides = [1, 1]} : vector<8x512xf32> to vector<4x512xf32>
    %16 = vector.extract_strided_slice %14 {offsets = [4, 0], sizes = [4, 512], strides = [1, 1]} : vector<8x512xf32> to vector<4x512xf32>
    %cst_11 = arith.constant dense<0.000000e+00> : vector<512xf32>
    %17 = vector.multi_reduction <add>, %15, %cst_11 [0] : vector<4x512xf32> to vector<512xf32>
    %18 = vector.shape_cast %17 : vector<512xf32> to vector<1x512xf32>
    %cst_12 = arith.constant 4.000000e+00 : f32
    %19 = vector.broadcast %cst_12 : f32 to vector<1x512xf32>
    %20 = arith.divf %18, %19 : vector<1x512xf32>
    %cst_13 = arith.constant dense<0.000000e+00> : vector<512xf32>
    %21 = vector.multi_reduction <add>, %16, %cst_13 [0] : vector<4x512xf32> to vector<512xf32>
    %22 = vector.shape_cast %21 : vector<512xf32> to vector<1x512xf32>
    %cst_14 = arith.constant 4.000000e+00 : f32
    %23 = vector.broadcast %cst_14 : f32 to vector<1x512xf32>
    %24 = arith.divf %22, %23 : vector<1x512xf32>
    %25 = vector.broadcast %20 : vector<1x512xf32> to vector<4x512xf32>
    %26 = arith.subf %15, %25 : vector<4x512xf32>
    %27 = arith.mulf %26, %26 : vector<4x512xf32>
    %cst_15 = arith.constant dense<0.000000e+00> : vector<512xf32>
    %28 = vector.multi_reduction <add>, %27, %cst_15 [0] : vector<4x512xf32> to vector<512xf32>
    %29 = vector.shape_cast %28 : vector<512xf32> to vector<1x512xf32>
    %cst_16 = arith.constant 4.000000e+00 : f32
    %30 = vector.broadcast %cst_16 : f32 to vector<1x512xf32>
    %31 = arith.divf %29, %30 : vector<1x512xf32>
    %32 = vector.broadcast %24 : vector<1x512xf32> to vector<4x512xf32>
    %33 = arith.subf %16, %32 : vector<4x512xf32>
    %34 = arith.mulf %33, %33 : vector<4x512xf32>
    %cst_17 = arith.constant dense<0.000000e+00> : vector<512xf32>
    %35 = vector.multi_reduction <add>, %34, %cst_17 [0] : vector<4x512xf32> to vector<512xf32>
    %36 = vector.shape_cast %35 : vector<512xf32> to vector<1x512xf32>
    %cst_18 = arith.constant 4.000000e+00 : f32
    %37 = vector.broadcast %cst_18 : f32 to vector<1x512xf32>
    %38 = arith.divf %36, %37 : vector<1x512xf32>
    %39 = tpu.iota {dimensions = array<i32: 0>} : vector<8x1xi32>
    %c4_i32 = arith.constant 4 : i32
    %40 = vector.broadcast %c4_i32 : i32 to vector<8x1xi32>
    %41 = arith.cmpi sge, %39, %40 : vector<8x1xi32>
    %42 = vector.shape_cast %41 : vector<8x1xi1> to vector<8x1xi1>
    %43 = vector.broadcast %42 : vector<8x1xi1> to vector<8x512xi1>
    %44 = vector.shape_cast %24 : vector<1x512xf32> to vector<1x512xf32>
    %45 = vector.broadcast %44 : vector<1x512xf32> to vector<8x512xf32>
    %46 = vector.shape_cast %20 : vector<1x512xf32> to vector<1x512xf32>
    %47 = vector.broadcast %46 : vector<1x512xf32> to vector<8x512xf32>
    %48 = arith.select %43, %45, %47 : vector<8x512xi1>, vector<8x512xf32>
    %49 = vector.shape_cast %41 : vector<8x1xi1> to vector<8x1xi1>
    %50 = vector.broadcast %49 : vector<8x1xi1> to vector<8x512xi1>
    %51 = vector.shape_cast %38 : vector<1x512xf32> to vector<1x512xf32>
    %52 = vector.broadcast %51 : vector<1x512xf32> to vector<8x512xf32>
    %53 = vector.shape_cast %31 : vector<1x512xf32> to vector<1x512xf32>
    %54 = vector.broadcast %53 : vector<1x512xf32> to vector<8x512xf32>
    %55 = arith.select %50, %52, %54 : vector<8x512xi1>, vector<8x512xf32>
    %56 = arith.subf %14, %48 : vector<8x512xf32>
    %cst_19 = arith.constant 9.99999974E-6 : f32
    %57 = vector.broadcast %cst_19 : f32 to vector<8x512xf32>
    %58 = arith.addf %55, %57 : vector<8x512xf32>
    %59 = math.rsqrt %58 : vector<8x512xf32>
    %60 = arith.mulf %56, %59 : vector<8x512xf32>
    %c0_20 = arith.constant 0 : index
    %c0_21 = arith.constant 0 : index
    %61 = vector.load %arg4[%c0_20, %c0_21] : memref<1x512xf32, #tpu.memory_space<vmem>>, vector<1x512xf32>
    %62 = vector.broadcast %61 : vector<1x512xf32> to vector<8x512xf32>
    %63 = arith.mulf %60, %62 : vector<8x512xf32>
    %c0_22 = arith.constant 0 : index
    %c0_23 = arith.constant 0 : index
    %64 = vector.load %arg5[%c0_22, %c0_23] : memref<1x512xf32, #tpu.memory_space<vmem>>, vector<1x512xf32>
    %65 = vector.broadcast %64 : vector<1x512xf32> to vector<8x512xf32>
    %66 = arith.addf %63, %65 : vector<8x512xf32>
    %cst_24 = arith.constant 0.000000e+00 : f32
    %67 = vector.broadcast %cst_24 : f32 to vector<8x512xf32>
    %68 = arith.maximumf %66, %67 : vector<8x512xf32>
    %69 = arith.truncf %68 : vector<8x512xf32> to vector<8x512xbf16>
    %c0_25 = arith.constant 0 : index
    %c0_26 = arith.constant 0 : index
    %70 = vector.load %arg6[%c0_25, %c0_26] : memref<512x128xf32, #tpu.memory_space<vmem>>, vector<512x128xf32>
    %71 = arith.truncf %70 : vector<512x128xf32> to vector<512x128xbf16>
    %cst_27 = arith.constant dense<0.000000e+00> : vector<8x128xf32>
    %72 = tpu.matmul %69, %71, %cst_27 {dimension_numbers = #tpu.dot_dimension_numbers<[1], [0], [0], [1], [0, 0, 1, 1], [], []>} : vector<8x512xbf16>, vector<512x128xbf16>, vector<8x128xf32> -> vector<8x128xf32>
    %c0_28 = arith.constant 0 : index
    %c0_29 = arith.constant 0 : index
    %73 = vector.load %arg7[%c0_28, %c0_29] : memref<1x128xf32, #tpu.memory_space<vmem>>, vector<1x128xf32>
    %74 = vector.broadcast %73 : vector<1x128xf32> to vector<8x128xf32>
    %75 = arith.addf %72, %74 : vector<8x128xf32>
    %76 = arith.mulf %75, %75 : vector<8x128xf32>
    %cst_30 = arith.constant dense<0.000000e+00> : vector<8xf32>
    %77 = vector.multi_reduction <add>, %76, %cst_30 [1] : vector<8x128xf32> to vector<8xf32>
    %78 = vector.shape_cast %77 : vector<8xf32> to vector<8x1xf32>
    %cst_31 = arith.constant 1.000000e-24 : f32
    %79 = vector.broadcast %cst_31 : f32 to vector<8x1xf32>
    %80 = arith.maximumf %78, %79 : vector<8x1xf32>
    %81 = math.rsqrt %80 : vector<8x1xf32>
    %82 = vector.broadcast %81 : vector<8x1xf32> to vector<8x128xf32>
    %83 = arith.mulf %75, %82 : vector<8x128xf32>
    %c0_32 = arith.constant 0 : index
    %c0_33 = arith.constant 0 : index
    %84 = vector.load %arg8[%c0_32, %c0_33] : memref<8x128xf32, #tpu.memory_space<vmem>>, vector<8x128xf32>
    tpu.vector_store %arg8[%c0_32, %c0_33], %83 {strides = array<i32>} : memref<8x128xf32, #tpu.memory_space<vmem>>, vector<8x128xf32>,
    %85 = vector.extract_strided_slice %83 {offsets = [0, 0], sizes = [4, 128], strides = [1, 1]} : vector<8x128xf32> to vector<4x128xf32>
    %86 = vector.extract_strided_slice %83 {offsets = [4, 0], sizes = [4, 128], strides = [1, 1]} : vector<8x128xf32> to vector<4x128xf32>
    %87 = arith.truncf %85 : vector<4x128xf32> to vector<4x128xbf16>
    %c0_34 = arith.constant 0 : index
    %c0_35 = arith.constant 0 : index
    %88 = vector.load %arg9[%c0_34, %c0_35] : memref<4x128xbf16, #tpu.memory_space<vmem>>, vector<4x128xbf16>
    tpu.vector_store %arg9[%c0_34, %c0_35], %87 {strides = array<i32>} : memref<4x128xbf16, #tpu.memory_space<vmem>>, vector<4x128xbf16>,
    %89 = arith.mulf %85, %86 : vector<4x128xf32>
    %cst_36 = arith.constant dense<0.000000e+00> : vector<4xf32>
    %90 = vector.multi_reduction <add>, %89, %cst_36 [1] : vector<4x128xf32> to vector<4xf32>
    %91 = vector.shape_cast %90 : vector<4xf32> to vector<4x1xf32>
    %cst_37 = arith.constant 14.2857141 : f32
    %92 = vector.broadcast %cst_37 : f32 to vector<4x1xf32>
    %93 = arith.mulf %91, %92 : vector<4x1xf32>
    %c0_38 = arith.constant 0 : index
    %c0_39 = arith.constant 0 : index
    %94 = vector.load %arg10[%c0_38, %c0_39] : memref<4x1xf32, #tpu.memory_space<vmem>>, vector<4x1xf32>
    tpu.vector_store %arg10[%c0_38, %c0_39], %93 {strides = array<i32>} : memref<4x1xf32, #tpu.memory_space<vmem>>, vector<4x1xf32>,
    return
  }
}

</mosaic_0001>

<llo_original>
// kernel: custom_moco_forward.3
$region0: #{custom_moco_forward.3}
  #allocation0 [shape = 'u32[]', space=smem, size = 0x4, offset = 0x4, fixed_abs, tag = 'smem constant byte address 0x4 - core index']
  #allocation1 [shape = 'u32[144,128]{1,0:T(1,128)}', space=vmem, size = 0x12000, scoped, tag = 'internal scratch']
  #allocation2 [shape = 'f32[4,1]{1,0:T(4,128)}', space=vmem, size = 0x800, scoped, tag = 'scratch operand']
  #allocation3 [shape = 'f32[4,1]{1,0:T(4,128)}', space=vmem, size = 0x800, scoped, tag = 'scratch operand']
  %s0 = inlined_call_operand.vmem [shape: bf16[4,128], index: 0, kind: input, shape index: {}]
  %s1 = inlined_call_operand.vmem [shape: bf16[128,1024], index: 1, kind: input, shape index: {}]
  %s2 = inlined_call_operand.vmem [shape: f32[1,4,1], index: 2, kind: output, shape index: {}]
  %s3 = sld [smem:[#allocation0]]
  $region26: #{custom_moco_forward.3} parent=0
    _
  %s5 = ssub.s32 1, %s3
  %s6 = scalar_select 0, %s5, %s3
  // Predicated region
  $region2: #{custom_moco_forward.3} parent=0 // pred_check
    _
  $region3: #{custom_moco_forward.3} parent=0 // pred_check_branch
    %8 = sbr.rel (0) target = $region5
  $region4: #{custom_moco_forward.3} parent=0 // pred_region
    _
  $region5: #{custom_moco_forward.3} parent=0 // pred_fallthru
    _
  // Predicated region
  $region6: #{custom_moco_forward.3} parent=0 // pred_check
    _
  $region7: #{custom_moco_forward.3} parent=0 // pred_check_branch
    %10 = sbr.rel (0) target = $region9
  $region8: #{custom_moco_forward.3} parent=0 // pred_region
    %s11 = sadd.s32 0, 0
    %s12 = smul.u32 8, %s11
    %p13 = scmp.lt.s32.totalorder %s12, 7
    %s14 = scalar_select %p13, %s12, 7
    %s15 = smul.addr %s14, 4
    %s16 = scalar_lea.vmem %s1, %s15
    %s17 = sadd.s32 0, 0
    %s18 = smul.u32 8, %s17
  $region9: #{custom_moco_forward.3} parent=0 // pred_fallthru
    _
  %s19 = sadd.s32 0, 0
  %s20 = smul.u32 8, %s19
  %p21 = scmp.lt.s32.totalorder %s20, 7
  %s22 = scalar_select %p21, %s20, 7
  %s23 = smul.addr %s22, 4
  %s24 = scalar_lea.vmem %s1, %s23
  %s25 = sadd.s32 0, 0
  %s26 = smul.u32 8, %s25
  %p27 = scmp.lt.s32.totalorder %s26, 7
  %s28 = scalar_select %p27, %s26, 7
  %s29 = smul.addr %s28, 4
  %s30 = scalar_lea.vmem %s1, %s29
  %s31 = sadd.s32 0, 0
  %s32 = smul.u32 8, %s31
  %p34 = scmp.eq.s32.totalorder 0, 0
  // Predicated region
  $region10: #{custom_moco_forward.3} parent=0 // pred_check
    %p35 = pneg %p34
  $region11: #{custom_moco_forward.3} parent=0 // pred_check_branch
    %37 = sbr.rel (%p35) target = $region13
  $region12: #{custom_moco_forward.3} parent=0 // pred_region
    %vm38 = vcmask 3072
    %39 = vst.msk [vmem:[#allocation2] sm:$0xf] %vm38, -inf
    %40 = vst.msk [vmem:[#allocation3] sm:$0xf] %vm38, 0.0
  $region13: #{custom_moco_forward.3} parent=0 // pred_fallthru
    _
  %v41 = vld [vmem:[%s0] sm:$0x3]
  %v42 = vld [vmem:[%s30] sm:$0xff]
  %v43 = vld [vmem:[%s30 + $0x8] sm:$0xff]
  %v44 = vld [vmem:[%s30 + $0x10] sm:$0xff]
  %v45 = vld [vmem:[%s30 + $0x18] sm:$0xff]
  %v46 = vld [vmem:[%s30 + $0x20] sm:$0xff]
  %v47 = vld [vmem:[%s30 + $0x28] sm:$0xff]
  %v48 = vld [vmem:[%s30 + $0x30] sm:$0xff]
  %v49 = vld [vmem:[%s30 + $0x38] sm:$0xff]
  %v50 = vld [vmem:[%s30 + $0x40] sm:$0xff]
  %v51 = vld [vmem:[%s30 + $0x48] sm:$0xff]
  %v52 = vld [vmem:[%s30 + $0x50] sm:$0xff]
  %v53 = vld [vmem:[%s30 + $0x58] sm:$0xff]
  %v54 = vld [vmem:[%s30 + $0x60] sm:$0xff]
  %v55 = vld [vmem:[%s30 + $0x68] sm:$0xff]
  %v56 = vld [vmem:[%s30 + $0x70] sm:$0xff]
  %v57 = vld [vmem:[%s30 + $0x78] sm:$0xff]
  %v58 = vld [vmem:[%s30 + $0x80] sm:$0xff]
  %v59 = vld [vmem:[%s30 + $0x88] sm:$0xff]
  %v60 = vld [vmem:[%s30 + $0x90] sm:$0xff]
  %v61 = vld [vmem:[%s30 + $0x98] sm:$0xff]
  %v62 = vld [vmem:[%s30 + $0xa0] sm:$0xff]
  %v63 = vld [vmem:[%s30 + $0xa8] sm:$0xff]
  %v64 = vld [vmem:[%s30 + $0xb0] sm:$0xff]
  %v65 = vld [vmem:[%s30 + $0xb8] sm:$0xff]
  %v66 = vld [vmem:[%s30 + $0xc0] sm:$0xff]
  %v67 = vld [vmem:[%s30 + $0xc8] sm:$0xff]
  %v68 = vld [vmem:[%s30 + $0xd0] sm:$0xff]
  %v69 = vld [vmem:[%s30 + $0xd8] sm:$0xff]
  %v70 = vld [vmem:[%s30 + $0xe0] sm:$0xff]
  %v71 = vld [vmem:[%s30 + $0xe8] sm:$0xff]
  %v72 = vld [vmem:[%s30 + $0xf0] sm:$0xff]
  %v73 = vld [vmem:[%s30 + $0xf8] sm:$0xff]
  %v74 = vld [vmem:[%s30 + $0x100] sm:$0xff]
  %v75 = vld [vmem:[%s30 + $0x108] sm:$0xff]
  %v76 = vld [vmem:[%s30 + $0x110] sm:$0xff]
  %v77 = vld [vmem:[%s30 + $0x118] sm:$0xff]
  %v78 = vld [vmem:[%s30 + $0x120] sm:$0xff]
  %v79 = vld [vmem:[%s30 + $0x128] sm:$0xff]
  %v80 = vld [vmem:[%s30 + $0x130] sm:$0xff]
  %v81 = vld [vmem:[%s30 + $0x138] sm:$0xff]
  %v82 = vld [vmem:[%s30 + $0x140] sm:$0xff]
  %v83 = vld [vmem:[%s30 + $0x148] sm:$0xff]
  %v84 = vld [vmem:[%s30 + $0x150] sm:$0xff]
  %v85 = vld [vmem:[%s30 + $0x158] sm:$0xff]
  %v86 = vld [vmem:[%s30 + $0x160] sm:$0xff]
  %v87 = vld [vmem:[%s30 + $0x168] sm:$0xff]
  %v88 = vld [vmem:[%s30 + $0x170] sm:$0xff]
  %v89 = vld [vmem:[%s30 + $0x178] sm:$0xff]
  %v90 = vld [vmem:[%s30 + $0x180] sm:$0xff]
  %v91 = vld [vmem:[%s30 + $0x188] sm:$0xff]
  %v92 = vld [vmem:[%s30 + $0x190] sm:$0xff]
  %v93 = vld [vmem:[%s30 + $0x198] sm:$0xff]
  %v94 = vld [vmem:[%s30 + $0x1a0] sm:$0xff]
  %v95 = vld [vmem:[%s30 + $0x1a8] sm:$0xff]
  %v96 = vld [vmem:[%s30 + $0x1b0] sm:$0xff]
  %v97 = vld [vmem:[%s30 + $0x1b8] sm:$0xff]
  %v98 = vld [vmem:[%s30 + $0x1c0] sm:$0xff]
  %v99 = vld [vmem:[%s30 + $0x1c8] sm:$0xff]
  %v100 = vld [vmem:[%s30 + $0x1d0] sm:$0xff]
  %v101 = vld [vmem:[%s30 + $0x1d8] sm:$0xff]
  %v102 = vld [vmem:[%s30 + $0x1e0] sm:$0xff]
  %v103 = vld [vmem:[%s30 + $0x1e8] sm:$0xff]
  %v104 = vld [vmem:[%s30 + $0x1f0] sm:$0xff]
  %v105 = vld [vmem:[%s30 + $0x1f8] sm:$0xff]
  %v170 = vunpack.c.l.b16 %v42
  %v171 = vunpack.c.h.b16 %v42
  %v172 = vunpack.c.l.b16 %v43
  %v173 = vunpack.c.h.b16 %v43
  %v174 = vunpack.c.l.b16 %v44
  %v175 = vunpack.c.h.b16 %v44
  %v176 = vunpack.c.l.b16 %v45
  %v177 = vunpack.c.h.b16 %v45
  %v178 = vunpack.c.l.b16 %v46
  %v179 = vunpack.c.h.b16 %v46
  %v180 = vunpack.c.l.b16 %v47
  %v181 = vunpack.c.h.b16 %v47
  %v182 = vunpack.c.l.b16 %v48
  %v183 = vunpack.c.h.b16 %v48
  %v184 = vunpack.c.l.b16 %v49
  %v185 = vunpack.c.h.b16 %v49
  %v186 = vunpack.c.l.b16 %v50
  %v187 = vunpack.c.h.b16 %v50
  %v188 = vunpack.c.l.b16 %v51
  %v189 = vunpack.c.h.b16 %v51
  %v190 = vunpack.c.l.b16 %v52
  %v191 = vunpack.c.h.b16 %v52
  %v192 = vunpack.c.l.b16 %v53
  %v193 = vunpack.c.h.b16 %v53
  %v194 = vunpack.c.l.b16 %v54
  %v195 = vunpack.c.h.b16 %v54
  %v196 = vunpack.c.l.b16 %v55
  %v197 = vunpack.c.h.b16 %v55
  %v198 = vunpack.c.l.b16 %v56
  %v199 = vunpack.c.h.b16 %v56
  %v200 = vunpack.c.l.b16 %v57
  %v201 = vunpack.c.h.b16 %v57
  %v202 = vunpack.c.l.b16 %v58
  %v203 = vunpack.c.h.b16 %v58
  %v204 = vunpack.c.l.b16 %v59
  %v205 = vunpack.c.h.b16 %v59
  %v206 = vunpack.c.l.b16 %v60
  %v207 = vunpack.c.h.b16 %v60
  %v208 = vunpack.c.l.b16 %v61
  %v209 = vunpack.c.h.b16 %v61
  %v210 = vunpack.c.l.b16 %v62
  %v211 = vunpack.c.h.b16 %v62
  %v212 = vunpack.c.l.b16 %v63
  %v213 = vunpack.c.h.b16 %v63
  %v214 = vunpack.c.l.b16 %v64
  %v215 = vunpack.c.h.b16 %v64
  %v216 = vunpack.c.l.b16 %v65
  %v217 = vunpack.c.h.b16 %v65
  %v218 = vunpack.c.l.b16 %v66
  %v219 = vunpack.c.h.b16 %v66
  %v220 = vunpack.c.l.b16 %v67
  %v221 = vunpack.c.h.b16 %v67
  %v222 = vunpack.c.l.b16 %v68
  %v223 = vunpack.c.h.b16 %v68
  %v224 = vunpack.c.l.b16 %v69
  %v225 = vunpack.c.h.b16 %v69
  %v226 = vunpack.c.l.b16 %v70
  %v227 = vunpack.c.h.b16 %v70
  %v228 = vunpack.c.l.b16 %v71
  %v229 = vunpack.c.h.b16 %v71
  %v230 = vunpack.c.l.b16 %v72
  %v231 = vunpack.c.h.b16 %v72
  %v232 = vunpack.c.l.b16 %v73
  %v233 = vunpack.c.h.b16 %v73
  %v234 = vunpack.c.l.b16 %v74
  %v235 = vunpack.c.h.b16 %v74
  %v236 = vunpack.c.l.b16 %v75
  %v237 = vunpack.c.h.b16 %v75
  %v238 = vunpack.c.l.b16 %v76
  %v239 = vunpack.c.h.b16 %v76
  %v240 = vunpack.c.l.b16 %v77
  %v241 = vunpack.c.h.b16 %v77
  %v242 = vunpack.c.l.b16 %v78
  %v243 = vunpack.c.h.b16 %v78
  %v244 = vunpack.c.l.b16 %v79
  %v245 = vunpack.c.h.b16 %v79
  %v246 = vunpack.c.l.b16 %v80
  %v247 = vunpack.c.h.b16 %v80
  %v248 = vunpack.c.l.b16 %v81
  %v249 = vunpack.c.h.b16 %v81
  %v250 = vunpack.c.l.b16 %v82
  %v251 = vunpack.c.h.b16 %v82
  %v252 = vunpack.c.l.b16 %v83
  %v253 = vunpack.c.h.b16 %v83
  %v254 = vunpack.c.l.b16 %v84
  %v255 = vunpack.c.h.b16 %v84
  %v256 = vunpack.c.l.b16 %v85
  %v257 = vunpack.c.h.b16 %v85
  %v258 = vunpack.c.l.b16 %v86
  %v259 = vunpack.c.h.b16 %v86
  %v260 = vunpack.c.l.b16 %v87
  %v261 = vunpack.c.h.b16 %v87
  %v262 = vunpack.c.l.b16 %v88
  %v263 = vunpack.c.h.b16 %v88
  %v264 = vunpack.c.l.b16 %v89
  %v265 = vunpack.c.h.b16 %v89
  %v266 = vunpack.c.l.b16 %v90
  %v267 = vunpack.c.h.b16 %v90
  %v268 = vunpack.c.l.b16 %v91
  %v269 = vunpack.c.h.b16 %v91
  %v270 = vunpack.c.l.b16 %v92
  %v271 = vunpack.c.h.b16 %v92
  %v272 = vunpack.c.l.b16 %v93
  %v273 = vunpack.c.h.b16 %v93
  %v274 = vunpack.c.l.b16 %v94
  %v275 = vunpack.c.h.b16 %v94
  %v276 = vunpack.c.l.b16 %v95
  %v277 = vunpack.c.h.b16 %v95
  %v278 = vunpack.c.l.b16 %v96
  %v279 = vunpack.c.h.b16 %v96
  %v280 = vunpack.c.l.b16 %v97
  %v281 = vunpack.c.h.b16 %v97
  %v282 = vunpack.c.l.b16 %v98
  %v283 = vunpack.c.h.b16 %v98
  %v284 = vunpack.c.l.b16 %v99
  %v285 = vunpack.c.h.b16 %v99
  %v286 = vunpack.c.l.b16 %v100
  %v287 = vunpack.c.h.b16 %v100
  %v288 = vunpack.c.l.b16 %v101
  %v289 = vunpack.c.h.b16 %v101
  %v290 = vunpack.c.l.b16 %v102
  %v291 = vunpack.c.h.b16 %v102
  %v292 = vunpack.c.l.b16 %v103
  %v293 = vunpack.c.h.b16 %v103
  %v294 = vunpack.c.l.b16 %v104
  %v295 = vunpack.c.h.b16 %v104
  %v296 = vunpack.c.l.b16 %v105
  %v297 = vunpack.c.h.b16 %v105
  %v298 = vpack.c.b16 %v178, %v170
  %v299 = vpack.c.b16 %v179, %v171
  %v300 = vpack.c.b16 %v180, %v172
  %v301 = vpack.c.b16 %v181, %v173
  %v302 = vpack.c.b16 %v182, %v174
  %v303 = vpack.c.b16 %v183, %v175
  %v304 = vpack.c.b16 %v184, %v176
  %v305 = vpack.c.b16 %v185, %v177
  %v306 = vpack.c.b16 %v194, %v186
  %v307 = vpack.c.b16 %v195, %v187
  %v308 = vpack.c.b16 %v196, %v188
  %v309 = vpack.c.b16 %v197, %v189
  %v310 = vpack.c.b16 %v198, %v190
  %v311 = vpack.c.b16 %v199, %v191
  %v312 = vpack.c.b16 %v200, %v192
  %v313 = vpack.c.b16 %v201, %v193
  %v314 = vpack.c.b16 %v210, %v202
  %v315 = vpack.c.b16 %v211, %v203
  %v316 = vpack.c.b16 %v212, %v204
  %v317 = vpack.c.b16 %v213, %v205
  %v318 = vpack.c.b16 %v214, %v206
  %v319 = vpack.c.b16 %v215, %v207
  %v320 = vpack.c.b16 %v216, %v208
  %v321 = vpack.c.b16 %v217, %v209
  %v322 = vpack.c.b16 %v226, %v218
  %v323 = vpack.c.b16 %v227, %v219
  %v324 = vpack.c.b16 %v228, %v220
  %v325 = vpack.c.b16 %v229, %v221
  %v326 = vpack.c.b16 %v230, %v222
  %v327 = vpack.c.b16 %v231, %v223
  %v328 = vpack.c.b16 %v232, %v224
  %v329 = vpack.c.b16 %v233, %v225
  %v330 = vpack.c.b16 %v242, %v234
  %v331 = vpack.c.b16 %v243, %v235
  %v332 = vpack.c.b16 %v244, %v236
  %v333 = vpack.c.b16 %v245, %v237
  %v334 = vpack.c.b16 %v246, %v238
  %v335 = vpack.c.b16 %v247, %v239
  %v336 = vpack.c.b16 %v248, %v240
  %v337 = vpack.c.b16 %v249, %v241
  %v338 = vpack.c.b16 %v258, %v250
  %v339 = vpack.c.b16 %v259, %v251
  %v340 = vpack.c.b16 %v260, %v252
  %v341 = vpack.c.b16 %v261, %v253
  %v342 = vpack.c.b16 %v262, %v254
  %v343 = vpack.c.b16 %v263, %v255
  %v344 = vpack.c.b16 %v264, %v256
  %v345 = vpack.c.b16 %v265, %v257
  %v346 = vpack.c.b16 %v274, %v266
  %v347 = vpack.c.b16 %v275, %v267
  %v348 = vpack.c.b16 %v276, %v268
  %v349 = vpack.c.b16 %v277, %v269
  %v350 = vpack.c.b16 %v278, %v270
  %v351 = vpack.c.b16 %v279, %v271
  %v352 = vpack.c.b16 %v280, %v272
  %v353 = vpack.c.b16 %v281, %v273
  %v354 = vpack.c.b16 %v290, %v282
  %v355 = vpack.c.b16 %v291, %v283
  %v356 = vpack.c.b16 %v292, %v284
  %v357 = vpack.c.b16 %v293, %v285
  %v358 = vpack.c.b16 %v294, %v286
  %v359 = vpack.c.b16 %v295, %v287
  %v360 = vpack.c.b16 %v296, %v288
  %v361 = vpack.c.b16 %v297, %v289
  %426 = vmatprep.subr.bf16.mxu0 %v355
  %427 = vmatpush1.bf16.msra.mxu0 %v354
  %428 = vmatprep.subr.bf16.mxu0 %v347
  %429 = vmatpush1.bf16.msra.mxu0 %v346
  %430 = vmatprep.subr.bf16.mxu0 %v339
  %431 = vmatpush1.bf16.msra.mxu0 %v338
  %432 = vmatprep.subr.bf16.mxu0 %v331
  %433 = vmatpush1.bf16.msra.mxu0 %v330
  %434 = vmatprep.subr.bf16.mxu0 %v323
  %435 = vmatpush1.bf16.msra.mxu0 %v322
  %436 = vmatprep.subr.bf16.mxu0 %v315
  %437 = vmatpush1.bf16.msra.mxu0 %v314
  %438 = vmatprep.subr.bf16.mxu0 %v307
  %439 = vmatpush1.bf16.msra.mxu0 %v306
  %440 = vmatprep.subr.bf16.mxu0 %v299
  %441 = vmatpush1.bf16.msra.mxu0 %v298
  %442 = vmatprep.subr.bf16.mxu0 0
  %443 = vmatpush2.bf16.msra.mxu0 0
  %444 = vmatprep.subr.bf16.mxu0 0
  %445 = vmatpush2.bf16.msra.mxu0 0
  %446 = vmatprep.subr.bf16.mxu0 0
  %447 = vmatpush2.bf16.msra.mxu0 0
  %448 = vmatprep.subr.bf16.mxu0 0
  %449 = vmatpush2.bf16.msra.mxu0 0
  %450 = vmatprep.subr.bf16.mxu0 0
  %451 = vmatpush2.bf16.msra.mxu0 0
  %452 = vmatprep.subr.bf16.mxu0 0
  %453 = vmatpush2.bf16.msra.mxu0 0
  %454 = vmatprep.subr.bf16.mxu0 0
  %455 = vmatpush2.bf16.msra.mxu0 0
  %456 = vmatprep.subr.bf16.mxu0 0
  %457 = vmatpush2.bf16.msra.mxu0 0
  %458 = vmatprep.mubr.bf16.mxu0 0
  %459 = vmatmul.mubr.bf16.gmra.mxu0 %v41
  %v460 = vpop.f32.mrf.mxu0
  %v461 = vadd.f32 0.0, %v460
  %v462 = vpop.f32.mrf.mxu0
  %v463 = vadd.f32 0.0, %v462
  %v464 = vpop.f32.mrf.mxu0
  %v465 = vpop.f32.mrf.mxu0
  %466 = vdwg.mxu0
  %467 = vmatprep.subr.bf16.mxu0 %v357
  %468 = vmatpush1.bf16.msra.mxu0 %v356
  %469 = vmatprep.subr.bf16.mxu0 %v349
  %470 = vmatpush1.bf16.msra.mxu0 %v348
  %471 = vmatprep.subr.bf16.mxu0 %v341
  %472 = vmatpush1.bf16.msra.mxu0 %v340
  %473 = vmatprep.subr.bf16.mxu0 %v333
  %474 = vmatpush1.bf16.msra.mxu0 %v332
  %475 = vmatprep.subr.bf16.mxu0 %v325
  %476 = vmatpush1.bf16.msra.mxu0 %v324
  %477 = vmatprep.subr.bf16.mxu0 %v317
  %478 = vmatpush1.bf16.msra.mxu0 %v316
  %479 = vmatprep.subr.bf16.mxu0 %v309
  %480 = vmatpush1.bf16.msra.mxu0 %v308
  %481 = vmatprep.subr.bf16.mxu0 %v301
  %482 = vmatpush1.bf16.msra.mxu0 %v300
  %483 = vmatprep.subr.bf16.mxu0 0
  %484 = vmatpush2.bf16.msra.mxu0 0
  %485 = vmatprep.subr.bf16.mxu0 0
  %486 = vmatpush2.bf16.msra.mxu0 0
  %487 = vmatprep.subr.bf16.mxu0 0
  %488 = vmatpush2.bf16.msra.mxu0 0
  %489 = vmatprep.subr.bf16.mxu0 0
  %490 = vmatpush2.bf16.msra.mxu0 0
  %491 = vmatprep.subr.bf16.mxu0 0
  %492 = vmatpush2.bf16.msra.mxu0 0
  %493 = vmatprep.subr.bf16.mxu0 0
  %494 = vmatpush2.bf16.msra.mxu0 0
  %495 = vmatprep.subr.bf16.mxu0 0
  %496 = vmatpush2.bf16.msra.mxu0 0
  %497 = vmatprep.subr.bf16.mxu0 0
  %498 = vmatpush2.bf16.msra.mxu0 0
  %499 = vmatprep.mubr.bf16.mxu0 0
  %500 = vmatmul.mubr.bf16.gmra.mxu0 %v41
  %v501 = vpop.f32.mrf.mxu0
  %v502 = vadd.f32 0.0, %v501
  %v503 = vpop.f32.mrf.mxu0
  %v504 = vadd.f32 0.0, %v503
  %v505 = vpop.f32.mrf.mxu0
  %v506 = vpop.f32.mrf.mxu0
  %507 = vdwg.mxu0
  %508 = vmatprep.subr.bf16.mxu0 %v359
  %509 = vmatpush1.bf16.msra.mxu0 %v358
  %510 = vmatprep.subr.bf16.mxu0 %v351
  %511 = vmatpush1.bf16.msra.mxu0 %v350
  %512 = vmatprep.subr.bf16.mxu0 %v343
  %513 = vmatpush1.bf16.msra.mxu0 %v342
  %514 = vmatprep.subr.bf16.mxu0 %v335
  %515 = vmatpush1.bf16.msra.mxu0 %v334
  %516 = vmatprep.subr.bf16.mxu0 %v327
  %517 = vmatpush1.bf16.msra.mxu0 %v326
  %518 = vmatprep.subr.bf16.mxu0 %v319
  %519 = vmatpush1.bf16.msra.mxu0 %v318
  %520 = vmatprep.subr.bf16.mxu0 %v311
  %521 = vmatpush1.bf16.msra.mxu0 %v310
  %522 = vmatprep.subr.bf16.mxu0 %v303
  %523 = vmatpush1.bf16.msra.mxu0 %v302
  %524 = vmatprep.subr.bf16.mxu0 0
  %525 = vmatpush2.bf16.msra.mxu0 0
  %526 = vmatprep.subr.bf16.mxu0 0
  %527 = vmatpush2.bf16.msra.mxu0 0
  %528 = vmatprep.subr.bf16.mxu0 0
  %529 = vmatpush2.bf16.msra.mxu0 0
  %530 = vmatprep.subr.bf16.mxu0 0
  %531 = vmatpush2.bf16.msra.mxu0 0
  %532 = vmatprep.subr.bf16.mxu0 0
  %533 = vmatpush2.bf16.msra.mxu0 0
  %534 = vmatprep.subr.bf16.mxu0 0
  %535 = vmatpush2.bf16.msra.mxu0 0
  %536 = vmatprep.subr.bf16.mxu0 0
  %537 = vmatpush2.bf16.msra.mxu0 0
  %538 = vmatprep.subr.bf16.mxu0 0
  %539 = vmatpush2.bf16.msra.mxu0 0
  %540 = vmatprep.mubr.bf16.mxu0 0
  %541 = vmatmul.mubr.bf16.gmra.mxu0 %v41
  %v542 = vpop.f32.mrf.mxu0
  %v543 = vadd.f32 0.0, %v542
  %v544 = vpop.f32.mrf.mxu0
  %v545 = vadd.f32 0.0, %v544
  %v546 = vpop.f32.mrf.mxu0
  %v547 = vpop.f32.mrf.mxu0
  %548 = vdwg.mxu0
  %549 = vmatprep.subr.bf16.mxu0 %v361
  %550 = vmatpush1.bf16.msra.mxu0 %v360
  %551 = vmatprep.subr.bf16.mxu0 %v353
  %552 = vmatpush1.bf16.msra.mxu0 %v352
  %553 = vmatprep.subr.bf16.mxu0 %v345
  %554 = vmatpush1.bf16.msra.mxu0 %v344
  %555 = vmatprep.subr.bf16.mxu0 %v337
  %556 = vmatpush1.bf16.msra.mxu0 %v336
  %557 = vmatprep.subr.bf16.mxu0 %v329
  %558 = vmatpush1.bf16.msra.mxu0 %v328
  %559 = vmatprep.subr.bf16.mxu0 %v321
  %560 = vmatpush1.bf16.msra.mxu0 %v320
  %561 = vmatprep.subr.bf16.mxu0 %v313
  %562 = vmatpush1.bf16.msra.mxu0 %v312
  %563 = vmatprep.subr.bf16.mxu0 %v305
  %564 = vmatpush1.bf16.msra.mxu0 %v304
  %565 = vmatprep.subr.bf16.mxu0 0
  %566 = vmatpush2.bf16.msra.mxu0 0
  %567 = vmatprep.subr.bf16.mxu0 0
  %568 = vmatpush2.bf16.msra.mxu0 0
  %569 = vmatprep.subr.bf16.mxu0 0
  %570 = vmatpush2.bf16.msra.mxu0 0
  %571 = vmatprep.subr.bf16.mxu0 0
  %572 = vmatpush2.bf16.msra.mxu0 0
  %573 = vmatprep.subr.bf16.mxu0 0
  %574 = vmatpush2.bf16.msra.mxu0 0
  %575 = vmatprep.subr.bf16.mxu0 0
  %576 = vmatpush2.bf16.msra.mxu0 0
  %577 = vmatprep.subr.bf16.mxu0 0
  %578 = vmatpush2.bf16.msra.mxu0 0
  %579 = vmatprep.subr.bf16.mxu0 0
  %580 = vmatpush2.bf16.msra.mxu0 0
  %581 = vmatprep.mubr.bf16.mxu0 0
  %582 = vmatmul.mubr.bf16.gmra.mxu0 %v41
  %v583 = vpop.f32.mrf.mxu0
  %v584 = vadd.f32 0.0, %v583
  %v585 = vpop.f32.mrf.mxu0
  %v586 = vadd.f32 0.0, %v585
  %v587 = vpop.f32.mrf.mxu0
  %v588 = vpop.f32.mrf.mxu0
  %589 = vdwg.mxu0
  %v590 = vmul.f32 %v461, 14.285714
  %v591 = vmul.f32 %v463, 14.285714
  %v592 = vmul.f32 %v502, 14.285714
  %v593 = vmul.f32 %v504, 14.285714
  %v594 = vmul.f32 %v543, 14.285714
  %v595 = vmul.f32 %v545, 14.285714
  %v596 = vmul.f32 %v584, 14.285714
  %v597 = vmul.f32 %v586, 14.285714
  %v598 = vld [vmem:[#allocation2] sm:$0xf]
  %vm599 = vcmask 1043456
  %v600 = vsel %vm599, %v590, -inf
  %v601 = vsel %vm599, %v591, -inf
  %v602 = vsel %vm599, %v592, -inf
  %v603 = vsel %vm599, %v593, -inf
  %v604 = vsel %vm599, %v594, -inf
  %v605 = vmax.f32 %v600, %v604
  %v606 = vsel %vm599, %v595, -inf
  %v607 = vmax.f32 %v601, %v606
  %v608 = vsel %vm599, %v596, -inf
  %v609 = vmax.f32 %v602, %v608
  %v610 = vsel %vm599, %v597, -inf
  %v611 = vmax.f32 %v603, %v610
  %v612 = vmax.f32 %v605, %v607
  %v613 = vmax.f32 %v609, %v611
  %v614 = vmax.f32 %v612, %v613
  %615 = vmax.xlane.f32.xlu0 %v614
  %v616 = vpop.xlane.xlu0 %615
  %v617 = vmax.f32 %v598, %v616
  %v618 = vld [vmem:[#allocation3] sm:$0xf]
  %v619 = vsub.f32 %v598, %v617
  %v620 = vmul.f32 %v619, 1.442695
  %v621 = vpow.pop %v620
  %v622 = vmul.f32 %v618, %v621
  %624 = vset.pattern.permute.xlu0 0
  %625 = vperm.xlu0 %624, %v617
  %v626 = vpop.permute.xlu0 %625
  %v628 = vsub.f32 %v590, %v626
  %v629 = vsub.f32 %v591, %v626
  %v630 = vsub.f32 %v592, %v626
  %v631 = vsub.f32 %v593, %v626
  %v632 = vsub.f32 %v594, %v626
  %v633 = vsub.f32 %v595, %v626
  %v634 = vsub.f32 %v596, %v626
  %v635 = vsub.f32 %v597, %v626
  %v636 = vmul.f32 %v628, 1.442695
  %v637 = vpow.pop %v636
  %v638 = vmul.f32 %v629, 1.442695
  %v639 = vpow.pop %v638
  %v640 = vmul.f32 %v630, 1.442695
  %v641 = vpow.pop %v640
  %v642 = vmul.f32 %v631, 1.442695
  %v643 = vpow.pop %v642
  %v644 = vmul.f32 %v632, 1.442695
  %v645 = vpow.pop %v644
  %v646 = vmul.f32 %v633, 1.442695
  %v647 = vpow.pop %v646
  %v648 = vmul.f32 %v634, 1.442695
  %v649 = vpow.pop %v648
  %v650 = vmul.f32 %v635, 1.442695
  %v651 = vpow.pop %v650
  %v652 = vsel %vm599, %v637, 0.0
  %v653 = vsel %vm599, %v639, 0.0
  %v654 = vadd.f32 %v652, %v653
  %v655 = vsel %vm599, %v641, 0.0
  %v656 = vadd.f32 %v654, %v655
  %v657 = vsel %vm599, %v643, 0.0
  %v658 = vadd.f32 %v656, %v657
  %v659 = vsel %vm599, %v645, 0.0
  %v660 = vadd.f32 %v658, %v659
  %v661 = vsel %vm599, %v647, 0.0
  %v662 = vadd.f32 %v660, %v661
  %v663 = vsel %vm599, %v649, 0.0
  %v664 = vadd.f32 %v662, %v663
  %v665 = vsel %vm599, %v651, 0.0
  %v666 = vadd.f32 %v664, %v665
  %667 = vadd.xlane.f32.xlu0 %v666
  %v668 = vpop.xlane.xlu0 %667
  %v669 = vadd.f32 %v622, %v668
  %vm670 = vcmask 3072
  %671 = vst.msk [vmem:[#allocation3] sm:$0xf] %vm670, %v669
  %672 = vst.msk [vmem:[#allocation2] sm:$0xf] %vm670, %v617
  // Predicated region
  $region14: #{custom_moco_forward.3} parent=0 // pred_check
    %p673 = pneg %p34
  $region15: #{custom_moco_forward.3} parent=0 // pred_check_branch
    %675 = sbr.rel (%p673) target = $region17
  $region16: #{custom_moco_forward.3} parent=0 // pred_region
    %v676 = vld [vmem:[#allocation2] sm:$0xf]
    %v677 = vld [vmem:[#allocation3] sm:$0xf]
    %v678 = vlog2.pop %v677
    %v679 = vmul.f32 %v678, 0.6931472
    %v680 = vadd.f32 %v676, %v679
    %681 = vst.msk [vmem:[%s2] sm:$0xf] %vm670, %v680
  $region17: #{custom_moco_forward.3} parent=0 // pred_fallthru
    _
  // Predicated region
  $region18: #{custom_moco_forward.3} parent=0 // pred_check
    _
  $region19: #{custom_moco_forward.3} parent=0 // pred_check_branch
    %683 = sbr.rel (0) target = $region21
  $region20: #{custom_moco_forward.3} parent=0 // pred_region
    _
  $region21: #{custom_moco_forward.3} parent=0 // pred_fallthru
    _
  // Predicated region
  $region22: #{custom_moco_forward.3} parent=0 // pred_check
    _
  $region23: #{custom_moco_forward.3} parent=0 // pred_check_branch
    %685 = sbr.rel (0) target = $region25
  $region24: #{custom_moco_forward.3} parent=0 // pred_region
    _
  $region25: #{custom_moco_forward.3} parent=0 // pred_fallthru
    _

// kernel: custom_moco_forward.2
$region0: #{custom_moco_forward.2}
  #allocation0 [shape = 'u32[]', space=smem, size = 0x4, offset = 0x4, fixed_abs, tag = 'smem constant byte address 0x4 - core index']
  #allocation1 [shape = 'u32[144,128]{1,0:T(1,128)}', space=vmem, size = 0x12000, scoped, tag = 'internal scratch']
  %s0 = inlined_call_operand.vmem [shape: f32[8,8,16], index: 0, kind: input, shape index: {}]
  %s1 = inlined_call_operand.vmem [shape: f32[16,256], index: 1, kind: input, shape index: {}]
  %s2 = inlined_call_operand.vmem [shape: f32[1,256], index: 2, kind: input, shape index: {}]
  %s3 = inlined_call_operand.vmem [shape: f32[256,512], index: 3, kind: input, shape index: {}]
  %s4 = inlined_call_operand.vmem [shape: f32[1,512], index: 4, kind: input, shape index: {}]
  %s5 = inlined_call_operand.vmem [shape: f32[1,512], index: 5, kind: input, shape index: {}]
  %s6 = inlined_call_operand.hbm [shape: f32[512,128], index: 6, kind: input, shape index: {}]
  %s7 = inlined_call_operand.vmem [shape: f32[1,128], index: 7, kind: input, shape index: {}]
  %s8 = inlined_call_operand.vmem [shape: f32[8,128], index: 8, kind: output, shape index: {0}]
  %s9 = inlined_call_operand.vmem [shape: bf16[4,128], index: 9, kind: output, shape index: {1}]
  %s10 = inlined_call_operand.vmem [shape: f32[4,1], index: 10, kind: output, shape index: {2}]
  %11 = xla_tuple %s8, %s9, %s10
  %s12 = sld [smem:[#allocation0]]
  $region62: #{custom_moco_forward.2} parent=0
    _
  %s14 = ssub.s32 1, %s12
  %s15 = scalar_select 0, %s14, %s12
  $region1: #{custom_moco_forward.2} parent=0
    #allocation2 [shape = 'u8[262144]{0}', space=vmem, size = 0x40000, scoped, tag = 'input window, operand 6, single buffered']
    #allocation3 [shape = 's32[1]{0}', space=sflag, size = 0x4, scoped, tag = 'scoped memory for custom_moco_forward.2']
    %16 = vsyncpa [#allocation3], 0
    // Predicated region
    $region2: #{custom_moco_forward.2} parent=1 // pred_check
      _
    $region3: #{custom_moco_forward.2} parent=1 // pred_check_branch
      %18 = sbr.rel (0) target = $region5
    $region4: #{custom_moco_forward.2} parent=1 // pred_region
      _
    $region5: #{custom_moco_forward.2} parent=1 // pred_fallthru
      _
    // Predicated region
    $region6: #{custom_moco_forward.2} parent=1 // pred_check
      _
    $region7: #{custom_moco_forward.2} parent=1 // pred_check_branch
      %20 = sbr.rel (0) target = $region9
    $region8: #{custom_moco_forward.2} parent=1 // pred_region
      _
    $region9: #{custom_moco_forward.2} parent=1 // pred_fallthru
      _
    // Predicated region
    $region10: #{custom_moco_forward.2} parent=1 // pred_check
      _
    $region11: #{custom_moco_forward.2} parent=1 // pred_check_branch
      %22 = sbr.rel (0) target = $region13
    $region12: #{custom_moco_forward.2} parent=1 // pred_region
      _
    $region13: #{custom_moco_forward.2} parent=1 // pred_fallthru
      _
    // Predicated region
    $region14: #{custom_moco_forward.2} parent=1 // pred_check
      _
    $region15: #{custom_moco_forward.2} parent=1 // pred_check_branch
      %24 = sbr.rel (0) target = $region17
    $region16: #{custom_moco_forward.2} parent=1 // pred_region
      _
    $region17: #{custom_moco_forward.2} parent=1 // pred_fallthru
      _
    // Predicated region
    $region18: #{custom_moco_forward.2} parent=1 // pred_check
      _
    $region19: #{custom_moco_forward.2} parent=1 // pred_check_branch
      %26 = sbr.rel (0) target = $region21
    $region20: #{custom_moco_forward.2} parent=1 // pred_region
      _
    $region21: #{custom_moco_forward.2} parent=1 // pred_fallthru
      _
    // Predicated region
    $region22: #{custom_moco_forward.2} parent=1 // pred_check
      _
    $region23: #{custom_moco_forward.2} parent=1 // pred_check_branch
      %28 = sbr.rel (0) target = $region25
    $region24: #{custom_moco_forward.2} parent=1 // pred_region
      _
    $region25: #{custom_moco_forward.2} parent=1 // pred_fallthru
      _
    // Predicated region
    $region26: #{custom_moco_forward.2} parent=1 // pred_check
      _
    $region27: #{custom_moco_forward.2} parent=1 // pred_check_branch
      %30 = sbr.rel (0) target = $region29
    $region28: #{custom_moco_forward.2} parent=1 // pred_region
      %s32 = ssub.s32 8192, 8192
      %33 = vsyncadd [#allocation3], %s32
      %s34 = sshll.u32 [#allocation2], 4
      %s35 = int_to_ptr.vmem [resolvable:$true] %s34
      %40 = dma.hbm_to_vmem [thread:$0]  %s6, 8192, %s35, [#allocation3], 128, 128, 8
    $region29: #{custom_moco_forward.2} parent=1 // pred_fallthru
      _
    // Predicated region
    $region30: #{custom_moco_forward.2} parent=1 // pred_check
      _
    $region31: #{custom_moco_forward.2} parent=1 // pred_check_branch
      %42 = sbr.rel (0) target = $region33
    $region32: #{custom_moco_forward.2} parent=1 // pred_region
      _
    $region33: #{custom_moco_forward.2} parent=1 // pred_fallthru
      _
    // Predicated region
    $region34: #{custom_moco_forward.2} parent=1 // pred_check
      _
    $region35: #{custom_moco_forward.2} parent=1 // pred_check_branch
      %44 = sbr.rel (0) target = $region37
    $region36: #{custom_moco_forward.2} parent=1 // pred_region
      %45 = dma.done [#allocation3], 8192
    $region37: #{custom_moco_forward.2} parent=1 // pred_fallthru
      _
    %v47 = vld [vmem:[%s0] sm:$0xff]
    %v48 = vld [vmem:[%s0 + $0x8] sm:$0xff]
    %v49 = vld [vmem:[%s0 + $0x10] sm:$0xff]
    %v50 = vld [vmem:[%s0 + $0x18] sm:$0xff]
    %v51 = vld [vmem:[%s0 + $0x20] sm:$0xff]
    %v52 = vld [vmem:[%s0 + $0x28] sm:$0xff]
    %v53 = vld [vmem:[%s0 + $0x30] sm:$0xff]
    %v54 = vld [vmem:[%s0 + $0x38] sm:$0xff]
    %vm55 = vcmask 130048
    %v56 = vsel %vm55, %v47, 0.0
    %v57 = vrot.slane %v56, 4
    %v58 = vadd.f32 %v56, %v57
    %v59 = vrot.slane %v58, 2
    %v60 = vadd.f32 %v58, %v59
    %v61 = vrot.slane %v60, 1
    %v62 = vadd.f32 %v60, %v61
    %v63 = vsel %vm55, %v48, 0.0
    %v64 = vrot.slane %v63, 4
    %v65 = vadd.f32 %v63, %v64
    %v66 = vrot.slane %v65, 2
    %v67 = vadd.f32 %v65, %v66
    %v68 = vrot.slane %v67, 1
    %v69 = vadd.f32 %v67, %v68
    %v70 = vsel %vm55, %v49, 0.0
    %v71 = vrot.slane %v70, 4
    %v72 = vadd.f32 %v70, %v71
    %v73 = vrot.slane %v72, 2
    %v74 = vadd.f32 %v72, %v73
    %v75 = vrot.slane %v74, 1
    %v76 = vadd.f32 %v74, %v75
    %v77 = vsel %vm55, %v50, 0.0
    %v78 = vrot.slane %v77, 4
    %v79 = vadd.f32 %v77, %v78
    %v80 = vrot.slane %v79, 2
    %v81 = vadd.f32 %v79, %v80
    %v82 = vrot.slane %v81, 1
    %v83 = vadd.f32 %v81, %v82
    %v84 = vsel %vm55, %v51, 0.0
    %v85 = vrot.slane %v84, 4
    %v86 = vadd.f32 %v84, %v85
    %v87 = vrot.slane %v86, 2
    %v88 = vadd.f32 %v86, %v87
    %v89 = vrot.slane %v88, 1
    %v90 = vadd.f32 %v88, %v89
    %v91 = vsel %vm55, %v52, 0.0
    %v92 = vrot.slane %v91, 4
    %v93 = vadd.f32 %v91, %v92
    %v94 = vrot.slane %v93, 2
    %v95 = vadd.f32 %v93, %v94
    %v96 = vrot.slane %v95, 1
    %v97 = vadd.f32 %v95, %v96
    %v98 = vsel %vm55, %v53, 0.0
    %v99 = vrot.slane %v98, 4
    %v100 = vadd.f32 %v98, %v99
    %v101 = vrot.slane %v100, 2
    %v102 = vadd.f32 %v100, %v101
    %v103 = vrot.slane %v102, 1
    %v104 = vadd.f32 %v102, %v103
    %v105 = vsel %vm55, %v54, 0.0
    %v106 = vrot.slane %v105, 4
    %v107 = vadd.f32 %v105, %v106
    %v108 = vrot.slane %v107, 2
    %v109 = vadd.f32 %v107, %v108
    %v110 = vrot.slane %v109, 1
    %v111 = vadd.f32 %v109, %v110
    %v112 = vrcp.pop 8.0
    %v113 = vmul.f32 %v62, %v112
    %v114 = vmul.f32 %v69, %v112
    %v115 = vmul.f32 %v76, %v112
    %v116 = vmul.f32 %v83, %v112
    %v117 = vmul.f32 %v90, %v112
    %v118 = vmul.f32 %v97, %v112
    %v119 = vmul.f32 %v104, %v112
    %v120 = vmul.f32 %v111, %v112
    %v121 = vpack.c.bf16 %v113, %v113
    %v122 = vpack.c.bf16 %v114, %v114
    %v123 = vpack.c.bf16 %v115, %v115
    %v124 = vpack.c.bf16 %v116, %v116
    %v125 = vpack.c.bf16 %v117, %v117
    %v126 = vpack.c.bf16 %v118, %v118
    %v127 = vpack.c.bf16 %v119, %v119
    %v128 = vpack.c.bf16 %v120, %v120
    %v129 = vld [vmem:[%s1] sm:$0xff]
    %v130 = vld [vmem:[%s1 + $0x8] sm:$0xff]
    %v131 = vld [vmem:[%s1 + $0x10] sm:$0xff]
    %v132 = vld [vmem:[%s1 + $0x18] sm:$0xff]
    %v133 = vpack.c.bf16 %v131, %v129
    %v134 = vpack.c.bf16 %v132, %v130
    %v135 = vld [vmem:[%s2] sm:$0x3]
    %v137 = vlaneseq
    %v138 = vshrl.u32 %v137, 7
    %v139 = vsub.s32 0, %v138
    %v140 = vrot.slane %v135, %v139
    %v141 = vlaneseq
    %v142 = vshrl.u32 %v141, 7
    %v143 = vsub.s32 1, %v142
    %v144 = vrot.slane %v135, %v143
    %v155 = vunpack.c.l.b16 %v121
    %v156 = vunpack.c.l.b16 %v122
    %v157 = vunpack.c.l.b16 %v123
    %v158 = vunpack.c.l.b16 %v124
    %v159 = vunpack.c.l.b16 %v125
    %v160 = vunpack.c.l.b16 %v126
    %v161 = vunpack.c.l.b16 %v127
    %v162 = vunpack.c.l.b16 %v128
    %vm163 = vcmask 1041409
    %v164 = vsel %vm163, %v156, %v155
    %vm165 = vcmask 1042434
    %v166 = vsel %vm165, %v157, %v164
    %vm167 = vcmask 1043459
    %v168 = vsel %vm167, %v158, %v166
    %vm169 = vcmask 1044484
    %v170 = vsel %vm169, %v159, %v168
    %vm171 = vcmask 1045509
    %v172 = vsel %vm171, %v160, %v170
    %vm173 = vcmask 1046534
    %v174 = vsel %vm173, %v161, %v172
    %vm175 = vcmask 1047559
    %v176 = vsel %vm175, %v162, %v174
    %v177 = vpack.c.b16 %v176, %v176
    %v179 = vsel %vm55, %v177, 0
    %181 = vmatprep.subr.bf16.mxu0 0
    %182 = vmatpush1.bf16.msra.mxu0 0
    %183 = vmatprep.subr.bf16.mxu0 0
    %184 = vmatpush1.bf16.msra.mxu0 0
    %185 = vmatprep.subr.bf16.mxu0 0
    %186 = vmatpush1.bf16.msra.mxu0 0
    %187 = vmatprep.subr.bf16.mxu0 0
    %188 = vmatpush1.bf16.msra.mxu0 0
    %189 = vmatprep.subr.bf16.mxu0 0
    %190 = vmatpush1.bf16.msra.mxu0 0
    %191 = vmatprep.subr.bf16.mxu0 0
    %192 = vmatpush1.bf16.msra.mxu0 0
    %193 = vmatprep.subr.bf16.mxu0 0
    %194 = vmatpush1.bf16.msra.mxu0 0
    %195 = vmatprep.subr.bf16.mxu0 %v134
    %196 = vmatpush1.bf16.msra.mxu0 %v133
    %197 = vmatprep.subr.bf16.mxu0 0
    %198 = vmatpush2.bf16.msra.mxu0 0
    %199 = vmatprep.subr.bf16.mxu0 0
    %200 = vmatpush2.bf16.msra.mxu0 0
    %201 = vmatprep.subr.bf16.mxu0 0
    %202 = vmatpush2.bf16.msra.mxu0 0
    %203 = vmatprep.subr.bf16.mxu0 0
    %204 = vmatpush2.bf16.msra.mxu0 0
    %205 = vmatprep.subr.bf16.mxu0 0
    %206 = vmatpush2.bf16.msra.mxu0 0
    %207 = vmatprep.subr.bf16.mxu0 0
    %208 = vmatpush2.bf16.msra.mxu0 0
    %209 = vmatprep.subr.bf16.mxu0 0
    %210 = vmatpush2.bf16.msra.mxu0 0
    %211 = vmatprep.subr.bf16.mxu0 0
    %212 = vmatpush2.bf16.msra.mxu0 0
    %213 = vmatprep.mubr.bf16.mxu0 0
    %214 = vmatmul.mubr.bf16.gmra.mxu0 %v179
    %v215 = vpop.f32.mrf.mxu0
    %v216 = vadd.f32 %v140, %v215
    %v217 = vpop.f32.mrf.mxu0
    %v218 = vadd.f32 %v144, %v217
    %v219 = vpop.f32.mrf.mxu0
    %v220 = vpop.f32.mrf.mxu0
    %221 = vdwg.mxu0
    %v222 = vpack.c.bf16 %v216, %v216
    %v223 = vpack.c.bf16 %v218, %v218
    %v224 = vld [vmem:[%s3] sm:$0xff]
    %v225 = vld [vmem:[%s3 + $0x8] sm:$0xff]
    %v226 = vld [vmem:[%s3 + $0x10] sm:$0xff]
    %v227 = vld [vmem:[%s3 + $0x18] sm:$0xff]
    %v228 = vld [vmem:[%s3 + $0x20] sm:$0xff]
    %v229 = vld [vmem:[%s3 + $0x28] sm:$0xff]
    %v230 = vld [vmem:[%s3 + $0x30] sm:$0xff]
    %v231 = vld [vmem:[%s3 + $0x38] sm:$0xff]
    %v232 = vld [vmem:[%s3 + $0x40] sm:$0xff]
    %v233 = vld [vmem:[%s3 + $0x48] sm:$0xff]
    %v234 = vld [vmem:[%s3 + $0x50] sm:$0xff]
    %v235 = vld [vmem:[%s3 + $0x58] sm:$0xff]
    %v236 = vld [vmem:[%s3 + $0x60] sm:$0xff]
    %v237 = vld [vmem:[%s3 + $0x68] sm:$0xff]
    %v238 = vld [vmem:[%s3 + $0x70] sm:$0xff]
    %v239 = vld [vmem:[%s3 + $0x78] sm:$0xff]
    %v240 = vld [vmem:[%s3 + $0x80] sm:$0xff]
    %v241 = vld [vmem:[%s3 + $0x88] sm:$0xff]
    %v242 = vld [vmem:[%s3 + $0x90] sm:$0xff]
    %v243 = vld [vmem:[%s3 + $0x98] sm:$0xff]
    %v244 = vld [vmem:[%s3 + $0xa0] sm:$0xff]
    %v245 = vld [vmem:[%s3 + $0xa8] sm:$0xff]
    %v246 = vld [vmem:[%s3 + $0xb0] sm:$0xff]
    %v247 = vld [vmem:[%s3 + $0xb8] sm:$0xff]
    %v248 = vld [vmem:[%s3 + $0xc0] sm:$0xff]
    %v249 = vld [vmem:[%s3 + $0xc8] sm:$0xff]
    %v250 = vld [vmem:[%s3 + $0xd0] sm:$0xff]
    %v251 = vld [vmem:[%s3 + $0xd8] sm:$0xff]
    %v252 = vld [vmem:[%s3 + $0xe0] sm:$0xff]
    %v253 = vld [vmem:[%s3 + $0xe8] sm:$0xff]
    %v254 = vld [vmem:[%s3 + $0xf0] sm:$0xff]
    %v255 = vld [vmem:[%s3 + $0xf8] sm:$0xff]
    %v256 = vld [vmem:[%s3 + $0x100] sm:$0xff]
    %v257 = vld [vmem:[%s3 + $0x108] sm:$0xff]
    %v258 = vld [vmem:[%s3 + $0x110] sm:$0xff]
    %v259 = vld [vmem:[%s3 + $0x118] sm:$0xff]
    %v260 = vld [vmem:[%s3 + $0x120] sm:$0xff]
    %v261 = vld [vmem:[%s3 + $0x128] sm:$0xff]
    %v262 = vld [vmem:[%s3 + $0x130] sm:$0xff]
    %v263 = vld [vmem:[%s3 + $0x138] sm:$0xff]
    %v264 = vld [vmem:[%s3 + $0x140] sm:$0xff]
    %v265 = vld [vmem:[%s3 + $0x148] sm:$0xff]
    %v266 = vld [vmem:[%s3 + $0x150] sm:$0xff]
    %v267 = vld [vmem:[%s3 + $0x158] sm:$0xff]
    %v268 = vld [vmem:[%s3 + $0x160] sm:$0xff]
    %v269 = vld [vmem:[%s3 + $0x168] sm:$0xff]
    %v270 = vld [vmem:[%s3 + $0x170] sm:$0xff]
    %v271 = vld [vmem:[%s3 + $0x178] sm:$0xff]
    %v272 = vld [vmem:[%s3 + $0x180] sm:$0xff]
    %v273 = vld [vmem:[%s3 + $0x188] sm:$0xff]
    %v274 = vld [vmem:[%s3 + $0x190] sm:$0xff]
    %v275 = vld [vmem:[%s3 + $0x198] sm:$0xff]
    %v276 = vld [vmem:[%s3 + $0x1a0] sm:$0xff]
    %v277 = vld [vmem:[%s3 + $0x1a8] sm:$0xff]
    %v278 = vld [vmem:[%s3 + $0x1b0] sm:$0xff]
    %v279 = vld [vmem:[%s3 + $0x1b8] sm:$0xff]
    %v280 = vld [vmem:[%s3 + $0x1c0] sm:$0xff]
    %v281 = vld [vmem:[%s3 + $0x1c8] sm:$0xff]
    %v282 = vld [vmem:[%s3 + $0x1d0] sm:$0xff]
    %v283 = vld [vmem:[%s3 + $0x1d8] sm:$0xff]
    %v284 = vld [vmem:[%s3 + $0x1e0] sm:$0xff]
    %v285 = vld [vmem:[%s3 + $0x1e8] sm:$0xff]
    %v286 = vld [vmem:[%s3 + $0x1f0] sm:$0xff]
    %v287 = vld [vmem:[%s3 + $0x1f8] sm:$0xff]
    %v288 = vld [vmem:[%s3 + $0x200] sm:$0xff]
    %v289 = vld [vmem:[%s3 + $0x208] sm:$0xff]
    %v290 = vld [vmem:[%s3 + $0x210] sm:$0xff]
    %v291 = vld [vmem:[%s3 + $0x218] sm:$0xff]
    %v292 = vld [vmem:[%s3 + $0x220] sm:$0xff]
    %v293 = vld [vmem:[%s3 + $0x228] sm:$0xff]
    %v294 = vld [vmem:[%s3 + $0x230] sm:$0xff]
    %v295 = vld [vmem:[%s3 + $0x238] sm:$0xff]
    %v296 = vld [vmem:[%s3 + $0x240] sm:$0xff]
    %v297 = vld [vmem:[%s3 + $0x248] sm:$0xff]
    %v298 = vld [vmem:[%s3 + $0x250] sm:$0xff]
    %v299 = vld [vmem:[%s3 + $0x258] sm:$0xff]
    %v300 = vld [vmem:[%s3 + $0x260] sm:$0xff]
    %v301 = vld [vmem:[%s3 + $0x268] sm:$0xff]
    %v302 = vld [vmem:[%s3 + $0x270] sm:$0xff]
    %v303 = vld [vmem:[%s3 + $0x278] sm:$0xff]
    %v304 = vld [vmem:[%s3 + $0x280] sm:$0xff]
    %v305 = vld [vmem:[%s3 + $0x288] sm:$0xff]
    %v306 = vld [vmem:[%s3 + $0x290] sm:$0xff]
    %v307 = vld [vmem:[%s3 + $0x298] sm:$0xff]
    %v308 = vld [vmem:[%s3 + $0x2a0] sm:$0xff]
    %v309 = vld [vmem:[%s3 + $0x2a8] sm:$0xff]
    %v310 = vld [vmem:[%s3 + $0x2b0] sm:$0xff]
    %v311 = vld [vmem:[%s3 + $0x2b8] sm:$0xff]
    %v312 = vld [vmem:[%s3 + $0x2c0] sm:$0xff]
    %v313 = vld [vmem:[%s3 + $0x2c8] sm:$0xff]
    %v314 = vld [vmem:[%s3 + $0x2d0] sm:$0xff]
    %v315 = vld [vmem:[%s3 + $0x2d8] sm:$0xff]
    %v316 = vld [vmem:[%s3 + $0x2e0] sm:$0xff]
    %v317 = vld [vmem:[%s3 + $0x2e8] sm:$0xff]
    %v318 = vld [vmem:[%s3 + $0x2f0] sm:$0xff]
    %v319 = vld [vmem:[%s3 + $0x2f8] sm:$0xff]
    %v320 = vld [vmem:[%s3 + $0x300] sm:$0xff]
    %v321 = vld [vmem:[%s3 + $0x308] sm:$0xff]
    %v322 = vld [vmem:[%s3 + $0x310] sm:$0xff]
    %v323 = vld [vmem:[%s3 + $0x318] sm:$0xff]
    %v324 = vld [vmem:[%s3 + $0x320] sm:$0xff]
    %v325 = vld [vmem:[%s3 + $0x328] sm:$0xff]
    %v326 = vld [vmem:[%s3 + $0x330] sm:$0xff]
    %v327 = vld [vmem:[%s3 + $0x338] sm:$0xff]
    %v328 = vld [vmem:[%s3 + $0x340] sm:$0xff]
    %v329 = vld [vmem:[%s3 + $0x348] sm:$0xff]
    %v330 = vld [vmem:[%s3 + $0x350] sm:$0xff]
    %v331 = vld [vmem:[%s3 + $0x358] sm:$0xff]
    %v332 = vld [vmem:[%s3 + $0x360] sm:$0xff]
    %v333 = vld [vmem:[%s3 + $0x368] sm:$0xff]
    %v334 = vld [vmem:[%s3 + $0x370] sm:$0xff]
    %v335 = vld [vmem:[%s3 + $0x378] sm:$0xff]
    %v336 = vld [vmem:[%s3 + $0x380] sm:$0xff]
    %v337 = vld [vmem:[%s3 + $0x388] sm:$0xff]
    %v338 = vld [vmem:[%s3 + $0x390] sm:$0xff]
    %v339 = vld [vmem:[%s3 + $0x398] sm:$0xff]
    %v340 = vld [vmem:[%s3 + $0x3a0] sm:$0xff]
    %v341 = vld [vmem:[%s3 + $0x3a8] sm:$0xff]
    %v342 = vld [vmem:[%s3 + $0x3b0] sm:$0xff]
    %v343 = vld [vmem:[%s3 + $0x3b8] sm:$0xff]
    %v344 = vld [vmem:[%s3 + $0x3c0] sm:$0xff]
    %v345 = vld [vmem:[%s3 + $0x3c8] sm:$0xff]
    %v346 = vld [vmem:[%s3 + $0x3d0] sm:$0xff]
    %v347 = vld [vmem:[%s3 + $0x3d8] sm:$0xff]
    %v348 = vld [vmem:[%s3 + $0x3e0] sm:$0xff]
    %v349 = vld [vmem:[%s3 + $0x3e8] sm:$0xff]
    %v350 = vld [vmem:[%s3 + $0x3f0] sm:$0xff]
    %v351 = vld [vmem:[%s3 + $0x3f8] sm:$0xff]
    %v352 = vpack.c.bf16 %v228, %v224
    %v353 = vpack.c.bf16 %v229, %v225
    %v354 = vpack.c.bf16 %v230, %v226
    %v355 = vpack.c.bf16 %v231, %v227
    %v356 = vpack.c.bf16 %v236, %v232
    %v357 = vpack.c.bf16 %v237, %v233
    %v358 = vpack.c.bf16 %v238, %v234
    %v359 = vpack.c.bf16 %v239, %v235
    %v360 = vpack.c.bf16 %v244, %v240
    %v361 = vpack.c.bf16 %v245, %v241
    %v362 = vpack.c.bf16 %v246, %v242
    %v363 = vpack.c.bf16 %v247, %v243
    %v364 = vpack.c.bf16 %v252, %v248
    %v365 = vpack.c.bf16 %v253, %v249
    %v366 = vpack.c.bf16 %v254, %v250
    %v367 = vpack.c.bf16 %v255, %v251
    %v368 = vpack.c.bf16 %v260, %v256
    %v369 = vpack.c.bf16 %v261, %v257
    %v370 = vpack.c.bf16 %v262, %v258
    %v371 = vpack.c.bf16 %v263, %v259
    %v372 = vpack.c.bf16 %v268, %v264
    %v373 = vpack.c.bf16 %v269, %v265
    %v374 = vpack.c.bf16 %v270, %v266
    %v375 = vpack.c.bf16 %v271, %v267
    %v376 = vpack.c.bf16 %v276, %v272
    %v377 = vpack.c.bf16 %v277, %v273
    %v378 = vpack.c.bf16 %v278, %v274
    %v379 = vpack.c.bf16 %v279, %v275
    %v380 = vpack.c.bf16 %v284, %v280
    %v381 = vpack.c.bf16 %v285, %v281
    %v382 = vpack.c.bf16 %v286, %v282
    %v383 = vpack.c.bf16 %v287, %v283
    %v384 = vpack.c.bf16 %v292, %v288
    %v385 = vpack.c.bf16 %v293, %v289
    %v386 = vpack.c.bf16 %v294, %v290
    %v387 = vpack.c.bf16 %v295, %v291
    %v388 = vpack.c.bf16 %v300, %v296
    %v389 = vpack.c.bf16 %v301, %v297
    %v390 = vpack.c.bf16 %v302, %v298
    %v391 = vpack.c.bf16 %v303, %v299
    %v392 = vpack.c.bf16 %v308, %v304
    %v393 = vpack.c.bf16 %v309, %v305
    %v394 = vpack.c.bf16 %v310, %v306
    %v395 = vpack.c.bf16 %v311, %v307
    %v396 = vpack.c.bf16 %v316, %v312
    %v397 = vpack.c.bf16 %v317, %v313
    %v398 = vpack.c.bf16 %v318, %v314
    %v399 = vpack.c.bf16 %v319, %v315
    %v400 = vpack.c.bf16 %v324, %v320
    %v401 = vpack.c.bf16 %v325, %v321
    %v402 = vpack.c.bf16 %v326, %v322
    %v403 = vpack.c.bf16 %v327, %v323
    %v404 = vpack.c.bf16 %v332, %v328
    %v405 = vpack.c.bf16 %v333, %v329
    %v406 = vpack.c.bf16 %v334, %v330
    %v407 = vpack.c.bf16 %v335, %v331
    %v408 = vpack.c.bf16 %v340, %v336
    %v409 = vpack.c.bf16 %v341, %v337
    %v410 = vpack.c.bf16 %v342, %v338
    %v411 = vpack.c.bf16 %v343, %v339
    %v412 = vpack.c.bf16 %v348, %v344
    %v413 = vpack.c.bf16 %v349, %v345
    %v414 = vpack.c.bf16 %v350, %v346
    %v415 = vpack.c.bf16 %v351, %v347
    %416 = vmatprep.subr.bf16.mxu0 %v381
    %417 = vmatpush1.bf16.msra.mxu0 %v380
    %418 = vmatprep.subr.bf16.mxu0 %v377
    %419 = vmatpush1.bf16.msra.mxu0 %v376
    %420 = vmatprep.subr.bf16.mxu0 %v373
    %421 = vmatpush1.bf16.msra.mxu0 %v372
    %422 = vmatprep.subr.bf16.mxu0 %v369
    %423 = vmatpush1.bf16.msra.mxu0 %v368
    %424 = vmatprep.subr.bf16.mxu0 %v365
    %425 = vmatpush1.bf16.msra.mxu0 %v364
    %426 = vmatprep.subr.bf16.mxu0 %v361
    %427 = vmatpush1.bf16.msra.mxu0 %v360
    %428 = vmatprep.subr.bf16.mxu0 %v357
    %429 = vmatpush1.bf16.msra.mxu0 %v356
    %430 = vmatprep.subr.bf16.mxu0 %v353
    %431 = vmatpush1.bf16.msra.mxu0 %v352
    %432 = vmatprep.subr.bf16.mxu0 %v413
    %433 = vmatpush2.bf16.msra.mxu0 %v412
    %434 = vmatprep.subr.bf16.mxu0 %v409
    %435 = vmatpush2.bf16.msra.mxu0 %v408
    %436 = vmatprep.subr.bf16.mxu0 %v405
    %437 = vmatpush2.bf16.msra.mxu0 %v404
    %438 = vmatprep.subr.bf16.mxu0 %v401
    %439 = vmatpush2.bf16.msra.mxu0 %v400
    %440 = vmatprep.subr.bf16.mxu0 %v397
    %441 = vmatpush2.bf16.msra.mxu0 %v396
    %442 = vmatprep.subr.bf16.mxu0 %v393
    %443 = vmatpush2.bf16.msra.mxu0 %v392
    %444 = vmatprep.subr.bf16.mxu0 %v389
    %445 = vmatpush2.bf16.msra.mxu0 %v388
    %446 = vmatprep.subr.bf16.mxu0 %v385
    %447 = vmatpush2.bf16.msra.mxu0 %v384
    %448 = vmatprep.mubr.bf16.mxu0 %v223
    %449 = vmatmul.mubr.bf16.gmra.mxu0 %v222
    %v450 = vpop.f32.mrf.mxu0
    %v451 = vadd.f32 0.0, %v450
    %v452 = vpop.f32.mrf.mxu0
    %v453 = vadd.f32 0.0, %v452
    %v454 = vpop.f32.mrf.mxu0
    %v455 = vpop.f32.mrf.mxu0
    %456 = vdwg.mxu0
    %457 = vmatprep.subr.bf16.mxu0 %v383
    %458 = vmatpush1.bf16.msra.mxu0 %v382
    %459 = vmatprep.subr.bf16.mxu0 %v379
    %460 = vmatpush1.bf16.msra.mxu0 %v378
    %461 = vmatprep.subr.bf16.mxu0 %v375
    %462 = vmatpush1.bf16.msra.mxu0 %v374
    %463 = vmatprep.subr.bf16.mxu0 %v371
    %464 = vmatpush1.bf16.msra.mxu0 %v370
    %465 = vmatprep.subr.bf16.mxu0 %v367
    %466 = vmatpush1.bf16.msra.mxu0 %v366
    %467 = vmatprep.subr.bf16.mxu0 %v363
    %468 = vmatpush1.bf16.msra.mxu0 %v362
    %469 = vmatprep.subr.bf16.mxu0 %v359
    %470 = vmatpush1.bf16.msra.mxu0 %v358
    %471 = vmatprep.subr.bf16.mxu0 %v355
    %472 = vmatpush1.bf16.msra.mxu0 %v354
    %473 = vmatprep.subr.bf16.mxu0 %v415
    %474 = vmatpush2.bf16.msra.mxu0 %v414
    %475 = vmatprep.subr.bf16.mxu0 %v411
    %476 = vmatpush2.bf16.msra.mxu0 %v410
    %477 = vmatprep.subr.bf16.mxu0 %v407
    %478 = vmatpush2.bf16.msra.mxu0 %v406
    %479 = vmatprep.subr.bf16.mxu0 %v403
    %480 = vmatpush2.bf16.msra.mxu0 %v402
    %481 = vmatprep.subr.bf16.mxu0 %v399
    %482 = vmatpush2.bf16.msra.mxu0 %v398
    %483 = vmatprep.subr.bf16.mxu0 %v395
    %484 = vmatpush2.bf16.msra.mxu0 %v394
    %485 = vmatprep.subr.bf16.mxu0 %v391
    %486 = vmatpush2.bf16.msra.mxu0 %v390
    %487 = vmatprep.subr.bf16.mxu0 %v387
    %488 = vmatpush2.bf16.msra.mxu0 %v386
    %489 = vmatprep.mubr.bf16.mxu0 %v223
    %490 = vmatmul.mubr.bf16.gmra.mxu0 %v222
    %v491 = vpop.f32.mrf.mxu0
    %v492 = vadd.f32 0.0, %v491
    %v493 = vpop.f32.mrf.mxu0
    %v494 = vadd.f32 0.0, %v493
    %v495 = vpop.f32.mrf.mxu0
    %v496 = vpop.f32.mrf.mxu0
    %497 = vdwg.mxu0
    %vm498 = vcmask 1043456
    %v499 = vsel %vm498, %v451, 0.0
    %v500 = vrot.slane %v499, 4
    %v501 = vadd.f32 %v499, %v500
    %v502 = vrot.slane %v501, 2
    %v503 = vadd.f32 %v501, %v502
    %v504 = vrot.slane %v503, 1
    %v505 = vadd.f32 %v503, %v504
    %v506 = vsel %vm498, %v453, 0.0
    %v507 = vrot.slane %v506, 4
    %v508 = vadd.f32 %v506, %v507
    %v509 = vrot.slane %v508, 2
    %v510 = vadd.f32 %v508, %v509
    %v511 = vrot.slane %v510, 1
    %v512 = vadd.f32 %v510, %v511
    %v513 = vsel %vm498, %v492, 0.0
    %v514 = vrot.slane %v513, 4
    %v515 = vadd.f32 %v513, %v514
    %v516 = vrot.slane %v515, 2
    %v517 = vadd.f32 %v515, %v516
    %v518 = vrot.slane %v517, 1
    %v519 = vadd.f32 %v517, %v518
    %v520 = vsel %vm498, %v494, 0.0
    %v521 = vrot.slane %v520, 4
    %v522 = vadd.f32 %v520, %v521
    %v523 = vrot.slane %v522, 2
    %v524 = vadd.f32 %v522, %v523
    %v525 = vrot.slane %v524, 1
    %v526 = vadd.f32 %v524, %v525
    %v527 = vrcp.pop 4.0
    %v528 = vmul.f32 %v505, %v527
    %v529 = vmul.f32 %v512, %v527
    %v530 = vmul.f32 %v519, %v527
    %v531 = vmul.f32 %v526, %v527
    %v536 = vrot.slane %v451, 4
    %v537 = vrot.slane %v453, 4
    %v538 = vrot.slane %v492, 4
    %v539 = vrot.slane %v494, 4
    %v544 = vsel %vm498, %v536, 0.0
    %v545 = vrot.slane %v544, 4
    %v546 = vadd.f32 %v544, %v545
    %v547 = vrot.slane %v546, 2
    %v548 = vadd.f32 %v546, %v547
    %v549 = vrot.slane %v548, 1
    %v550 = vadd.f32 %v548, %v549
    %v551 = vsel %vm498, %v537, 0.0
    %v552 = vrot.slane %v551, 4
    %v553 = vadd.f32 %v551, %v552
    %v554 = vrot.slane %v553, 2
    %v555 = vadd.f32 %v553, %v554
    %v556 = vrot.slane %v555, 1
    %v557 = vadd.f32 %v555, %v556
    %v558 = vsel %vm498, %v538, 0.0
    %v559 = vrot.slane %v558, 4
    %v560 = vadd.f32 %v558, %v559
    %v561 = vrot.slane %v560, 2
    %v562 = vadd.f32 %v560, %v561
    %v563 = vrot.slane %v562, 1
    %v564 = vadd.f32 %v562, %v563
    %v565 = vsel %vm498, %v539, 0.0
    %v566 = vrot.slane %v565, 4
    %v567 = vadd.f32 %v565, %v566
    %v568 = vrot.slane %v567, 2
    %v569 = vadd.f32 %v567, %v568
    %v570 = vrot.slane %v569, 1
    %v571 = vadd.f32 %v569, %v570
    %v572 = vmul.f32 %v550, %v527
    %v573 = vmul.f32 %v557, %v527
    %v574 = vmul.f32 %v564, %v527
    %v575 = vmul.f32 %v571, %v527
    %v576 = vsub.f32 %v451, %v528
    %v577 = vsub.f32 %v453, %v529
    %v578 = vsub.f32 %v492, %v530
    %v579 = vsub.f32 %v494, %v531
    %v580 = vmul.f32 %v576, %v576
    %v581 = vmul.f32 %v577, %v577
    %v582 = vmul.f32 %v578, %v578
    %v583 = vmul.f32 %v579, %v579
    %v584 = vsel %vm498, %v580, 0.0
    %v585 = vrot.slane %v584, 4
    %v586 = vadd.f32 %v584, %v585
    %v587 = vrot.slane %v586, 2
    %v588 = vadd.f32 %v586, %v587
    %v589 = vrot.slane %v588, 1
    %v590 = vadd.f32 %v588, %v589
    %v591 = vsel %vm498, %v581, 0.0
    %v592 = vrot.slane %v591, 4
    %v593 = vadd.f32 %v591, %v592
    %v594 = vrot.slane %v593, 2
    %v595 = vadd.f32 %v593, %v594
    %v596 = vrot.slane %v595, 1
    %v597 = vadd.f32 %v595, %v596
    %v598 = vsel %vm498, %v582, 0.0
    %v599 = vrot.slane %v598, 4
    %v600 = vadd.f32 %v598, %v599
    %v601 = vrot.slane %v600, 2
    %v602 = vadd.f32 %v600, %v601
    %v603 = vrot.slane %v602, 1
    %v604 = vadd.f32 %v602, %v603
    %v605 = vsel %vm498, %v583, 0.0
    %v606 = vrot.slane %v605, 4
    %v607 = vadd.f32 %v605, %v606
    %v608 = vrot.slane %v607, 2
    %v609 = vadd.f32 %v607, %v608
    %v610 = vrot.slane %v609, 1
    %v611 = vadd.f32 %v609, %v610
    %v612 = vmul.f32 %v590, %v527
    %v613 = vmul.f32 %v597, %v527
    %v614 = vmul.f32 %v604, %v527
    %v615 = vmul.f32 %v611, %v527
    %v616 = vsub.f32 %v451, %v572
    %v617 = vsub.f32 %v453, %v573
    %v618 = vsub.f32 %v492, %v574
    %v619 = vsub.f32 %v494, %v575
    %v620 = vmul.f32 %v616, %v616
    %v621 = vmul.f32 %v617, %v617
    %v622 = vmul.f32 %v618, %v618
    %v623 = vmul.f32 %v619, %v619
    %v628 = vrot.slane %v620, 4
    %v629 = vrot.slane %v621, 4
    %v630 = vrot.slane %v622, 4
    %v631 = vrot.slane %v623, 4
    %v636 = vsel %vm498, %v628, 0.0
    %v637 = vrot.slane %v636, 4
    %v638 = vadd.f32 %v636, %v637
    %v639 = vrot.slane %v638, 2
    %v640 = vadd.f32 %v638, %v639
    %v641 = vrot.slane %v640, 1
    %v642 = vadd.f32 %v640, %v641
    %v643 = vsel %vm498, %v629, 0.0
    %v644 = vrot.slane %v643, 4
    %v645 = vadd.f32 %v643, %v644
    %v646 = vrot.slane %v645, 2
    %v647 = vadd.f32 %v645, %v646
    %v648 = vrot.slane %v647, 1
    %v649 = vadd.f32 %v647, %v648
    %v650 = vsel %vm498, %v630, 0.0
    %v651 = vrot.slane %v650, 4
    %v652 = vadd.f32 %v650, %v651
    %v653 = vrot.slane %v652, 2
    %v654 = vadd.f32 %v652, %v653
    %v655 = vrot.slane %v654, 1
    %v656 = vadd.f32 %v654, %v655
    %v657 = vsel %vm498, %v631, 0.0
    %v658 = vrot.slane %v657, 4
    %v659 = vadd.f32 %v657, %v658
    %v660 = vrot.slane %v659, 2
    %v661 = vadd.f32 %v659, %v660
    %v662 = vrot.slane %v661, 1
    %v663 = vadd.f32 %v661, %v662
    %v664 = vmul.f32 %v642, %v527
    %v665 = vmul.f32 %v649, %v527
    %v666 = vmul.f32 %v656, %v527
    %v667 = vmul.f32 %v663, %v527
    %v668 = vlaneseq
    %v669 = vshrl.u32 %v668, 7
    %vm670 = vcmp.ge.s32.totalorder %v669, 4
    %v671 = vsel %vm670, 1, 0
    %vm672 = vcmp.eq.s32.totalorder %v671, 1
    %v673 = vsel %vm672, %v572, %v528
    %v674 = vsel %vm672, %v573, %v529
    %v675 = vsel %vm672, %v574, %v530
    %v676 = vsel %vm672, %v575, %v531
    %v677 = vsel %vm672, %v664, %v612
    %v678 = vsel %vm672, %v665, %v613
    %v679 = vsel %vm672, %v666, %v614
    %v680 = vsel %vm672, %v667, %v615
    %v681 = vsub.f32 %v451, %v673
    %v682 = vsub.f32 %v453, %v674
    %v683 = vsub.f32 %v492, %v675
    %v684 = vsub.f32 %v494, %v676
    %v685 = vadd.f32 %v677, 1e-05
    %v686 = vadd.f32 %v678, 1e-05
    %v687 = vadd.f32 %v679, 1e-05
    %v688 = vadd.f32 %v680, 1e-05
    %v689 = vrsqrt.pop %v685
    %v690 = vrsqrt.pop %v686
    %v691 = vrsqrt.pop %v687
    %v692 = vrsqrt.pop %v688
    %v693 = vmul.f32 %v681, %v689
    %v694 = vmul.f32 %v682, %v690
    %v695 = vmul.f32 %v683, %v691
    %v696 = vmul.f32 %v684, %v692
    %v697 = vld [vmem:[%s4] sm:$0xf]
    %v699 = vlaneseq
    %v700 = vshrl.u32 %v699, 7
    %v701 = vsub.s32 0, %v700
    %v702 = vrot.slane %v697, %v701
    %v703 = vlaneseq
    %v704 = vshrl.u32 %v703, 7
    %v705 = vsub.s32 1, %v704
    %v706 = vrot.slane %v697, %v705
    %v707 = vlaneseq
    %v708 = vshrl.u32 %v707, 7
    %v709 = vsub.s32 2, %v708
    %v710 = vrot.slane %v697, %v709
    %v711 = vlaneseq
    %v712 = vshrl.u32 %v711, 7
    %v713 = vsub.s32 3, %v712
    %v714 = vrot.slane %v697, %v713
    %v719 = vmul.f32 %v693, %v702
    %v720 = vmul.f32 %v694, %v706
    %v721 = vmul.f32 %v695, %v710
    %v722 = vmul.f32 %v696, %v714
    %v723 = vld [vmem:[%s5] sm:$0xf]
    %v725 = vlaneseq
    %v726 = vshrl.u32 %v725, 7
    %v727 = vsub.s32 0, %v726
    %v728 = vrot.slane %v723, %v727
    %v729 = vlaneseq
    %v730 = vshrl.u32 %v729, 7
    %v731 = vsub.s32 1, %v730
    %v732 = vrot.slane %v723, %v731
    %v733 = vlaneseq
    %v734 = vshrl.u32 %v733, 7
    %v735 = vsub.s32 2, %v734
    %v736 = vrot.slane %v723, %v735
    %v737 = vlaneseq
    %v738 = vshrl.u32 %v737, 7
    %v739 = vsub.s32 3, %v738
    %v740 = vrot.slane %v723, %v739
    %v745 = vadd.f32 %v719, %v728
    %v746 = vadd.f32 %v720, %v732
    %v747 = vadd.f32 %v721, %v736
    %v748 = vadd.f32 %v722, %v740
    %v749 = vmax.f32 %v745, 0.0
    %v750 = vmax.f32 %v746, 0.0
    %v751 = vmax.f32 %v747, 0.0
    %v752 = vmax.f32 %v748, 0.0
    %v753 = vpack.c.bf16 %v749, %v749
    %v754 = vpack.c.bf16 %v750, %v750
    %v755 = vpack.c.bf16 %v751, %v751
    %v756 = vpack.c.bf16 %v752, %v752
    %v757 = vld [vmem:[#allocation2] sm:$0xff]
    %v758 = vld [vmem:[#allocation2 + $0x8] sm:$0xff]
    %v759 = vld [vmem:[#allocation2 + $0x10] sm:$0xff]
    %v760 = vld [vmem:[#allocation2 + $0x18] sm:$0xff]
    %v761 = vld [vmem:[#allocation2 + $0x20] sm:$0xff]
    %v762 = vld [vmem:[#allocation2 + $0x28] sm:$0xff]
    %v763 = vld [vmem:[#allocation2 + $0x30] sm:$0xff]
    %v764 = vld [vmem:[#allocation2 + $0x38] sm:$0xff]
    %v765 = vld [vmem:[#allocation2 + $0x40] sm:$0xff]
    %v766 = vld [vmem:[#allocation2 + $0x48] sm:$0xff]
    %v767 = vld [vmem:[#allocation2 + $0x50] sm:$0xff]
    %v768 = vld [vmem:[#allocation2 + $0x58] sm:$0xff]
    %v769 = vld [vmem:[#allocation2 + $0x60] sm:$0xff]
    %v770 = vld [vmem:[#allocation2 + $0x68] sm:$0xff]
    %v771 = vld [vmem:[#allocation2 + $0x70] sm:$0xff]
    %v772 = vld [vmem:[#allocation2 + $0x78] sm:$0xff]
    %v773 = vld [vmem:[#allocation2 + $0x80] sm:$0xff]
    %v774 = vld [vmem:[#allocation2 + $0x88] sm:$0xff]
    %v775 = vld [vmem:[#allocation2 + $0x90] sm:$0xff]
    %v776 = vld [vmem:[#allocation2 + $0x98] sm:$0xff]
    %v777 = vld [vmem:[#allocation2 + $0xa0] sm:$0xff]
    %v778 = vld [vmem:[#allocation2 + $0xa8] sm:$0xff]
    %v779 = vld [vmem:[#allocation2 + $0xb0] sm:$0xff]
    %v780 = vld [vmem:[#allocation2 + $0xb8] sm:$0xff]
    %v781 = vld [vmem:[#allocation2 + $0xc0] sm:$0xff]
    %v782 = vld [vmem:[#allocation2 + $0xc8] sm:$0xff]
    %v783 = vld [vmem:[#allocation2 + $0xd0] sm:$0xff]
    %v784 = vld [vmem:[#allocation2 + $0xd8] sm:$0xff]
    %v785 = vld [vmem:[#allocation2 + $0xe0] sm:$0xff]
    %v786 = vld [vmem:[#allocation2 + $0xe8] sm:$0xff]
    %v787 = vld [vmem:[#allocation2 + $0xf0] sm:$0xff]
    %v788 = vld [vmem:[#allocation2 + $0xf8] sm:$0xff]
    %v789 = vld [vmem:[#allocation2 + $0x100] sm:$0xff]
    %v790 = vld [vmem:[#allocation2 + $0x108] sm:$0xff]
    %v791 = vld [vmem:[#allocation2 + $0x110] sm:$0xff]
    %v792 = vld [vmem:[#allocation2 + $0x118] sm:$0xff]
    %v793 = vld [vmem:[#allocation2 + $0x120] sm:$0xff]
    %v794 = vld [vmem:[#allocation2 + $0x128] sm:$0xff]
    %v795 = vld [vmem:[#allocation2 + $0x130] sm:$0xff]
    %v796 = vld [vmem:[#allocation2 + $0x138] sm:$0xff]
    %v797 = vld [vmem:[#allocation2 + $0x140] sm:$0xff]
    %v798 = vld [vmem:[#allocation2 + $0x148] sm:$0xff]
    %v799 = vld [vmem:[#allocation2 + $0x150] sm:$0xff]
    %v800 = vld [vmem:[#allocation2 + $0x158] sm:$0xff]
    %v801 = vld [vmem:[#allocation2 + $0x160] sm:$0xff]
    %v802 = vld [vmem:[#allocation2 + $0x168] sm:$0xff]
    %v803 = vld [vmem:[#allocation2 + $0x170] sm:$0xff]
    %v804 = vld [vmem:[#allocation2 + $0x178] sm:$0xff]
    %v805 = vld [vmem:[#allocation2 + $0x180] sm:$0xff]
    %v806 = vld [vmem:[#allocation2 + $0x188] sm:$0xff]
    %v807 = vld [vmem:[#allocation2 + $0x190] sm:$0xff]
    %v808 = vld [vmem:[#allocation2 + $0x198] sm:$0xff]
    %v809 = vld [vmem:[#allocation2 + $0x1a0] sm:$0xff]
    %v810 = vld [vmem:[#allocation2 + $0x1a8] sm:$0xff]
    %v811 = vld [vmem:[#allocation2 + $0x1b0] sm:$0xff]
    %v812 = vld [vmem:[#allocation2 + $0x1b8] sm:$0xff]
    %v813 = vld [vmem:[#allocation2 + $0x1c0] sm:$0xff]
    %v814 = vld [vmem:[#allocation2 + $0x1c8] sm:$0xff]
    %v815 = vld [vmem:[#allocation2 + $0x1d0] sm:$0xff]
    %v816 = vld [vmem:[#allocation2 + $0x1d8] sm:$0xff]
    %v817 = vld [vmem:[#allocation2 + $0x1e0] sm:$0xff]
    %v818 = vld [vmem:[#allocation2 + $0x1e8] sm:$0xff]
    %v819 = vld [vmem:[#allocation2 + $0x1f0] sm:$0xff]
    %v820 = vld [vmem:[#allocation2 + $0x1f8] sm:$0xff]
    %v821 = vpack.c.bf16 %v758, %v757
    %v822 = vpack.c.bf16 %v760, %v759
    %v823 = vpack.c.bf16 %v762, %v761
    %v824 = vpack.c.bf16 %v764, %v763
    %v825 = vpack.c.bf16 %v766, %v765
    %v826 = vpack.c.bf16 %v768, %v767
    %v827 = vpack.c.bf16 %v770, %v769
    %v828 = vpack.c.bf16 %v772, %v771
    %v829 = vpack.c.bf16 %v774, %v773
    %v830 = vpack.c.bf16 %v776, %v775
    %v831 = vpack.c.bf16 %v778, %v777
    %v832 = vpack.c.bf16 %v780, %v779
    %v833 = vpack.c.bf16 %v782, %v781
    %v834 = vpack.c.bf16 %v784, %v783
    %v835 = vpack.c.bf16 %v786, %v785
    %v836 = vpack.c.bf16 %v788, %v787
    %v837 = vpack.c.bf16 %v790, %v789
    %v838 = vpack.c.bf16 %v792, %v791
    %v839 = vpack.c.bf16 %v794, %v793
    %v840 = vpack.c.bf16 %v796, %v795
    %v841 = vpack.c.bf16 %v798, %v797
    %v842 = vpack.c.bf16 %v800, %v799
    %v843 = vpack.c.bf16 %v802, %v801
    %v844 = vpack.c.bf16 %v804, %v803
    %v845 = vpack.c.bf16 %v806, %v805
    %v846 = vpack.c.bf16 %v808, %v807
    %v847 = vpack.c.bf16 %v810, %v809
    %v848 = vpack.c.bf16 %v812, %v811
    %v849 = vpack.c.bf16 %v814, %v813
    %v850 = vpack.c.bf16 %v816, %v815
    %v851 = vpack.c.bf16 %v818, %v817
    %v852 = vpack.c.bf16 %v820, %v819
    %v853 = vld [vmem:[%s7] sm:$0x1]
    %v855 = vlaneseq
    %v856 = vshrl.u32 %v855, 7
    %v857 = vsub.s32 0, %v856
    %v858 = vrot.slane %v853, %v857
    %860 = vmatprep.subr.bf16.mxu0 0
    %861 = vmatpush1.bf16.msra.mxu0 %v828
    %862 = vmatprep.subr.bf16.mxu0 0
    %863 = vmatpush1.bf16.msra.mxu0 %v827
    %864 = vmatprep.subr.bf16.mxu0 0
    %865 = vmatpush1.bf16.msra.mxu0 %v826
    %866 = vmatprep.subr.bf16.mxu0 0
    %867 = vmatpush1.bf16.msra.mxu0 %v825
    %868 = vmatprep.subr.bf16.mxu0 0
    %869 = vmatpush1.bf16.msra.mxu0 %v824
    %870 = vmatprep.subr.bf16.mxu0 0
    %871 = vmatpush1.bf16.msra.mxu0 %v823
    %872 = vmatprep.subr.bf16.mxu0 0
    %873 = vmatpush1.bf16.msra.mxu0 %v822
    %874 = vmatprep.subr.bf16.mxu0 0
    %875 = vmatpush1.bf16.msra.mxu0 %v821
    %876 = vmatprep.subr.bf16.mxu0 0
    %877 = vmatpush2.bf16.msra.mxu0 %v836
    %878 = vmatprep.subr.bf16.mxu0 0
    %879 = vmatpush2.bf16.msra.mxu0 %v835
    %880 = vmatprep.subr.bf16.mxu0 0
    %881 = vmatpush2.bf16.msra.mxu0 %v834
    %882 = vmatprep.subr.bf16.mxu0 0
    %883 = vmatpush2.bf16.msra.mxu0 %v833
    %884 = vmatprep.subr.bf16.mxu0 0
    %885 = vmatpush2.bf16.msra.mxu0 %v832
    %886 = vmatprep.subr.bf16.mxu0 0
    %887 = vmatpush2.bf16.msra.mxu0 %v831
    %888 = vmatprep.subr.bf16.mxu0 0
    %889 = vmatpush2.bf16.msra.mxu0 %v830
    %890 = vmatprep.subr.bf16.mxu0 0
    %891 = vmatpush2.bf16.msra.mxu0 %v829
    %892 = vmatprep.mubr.bf16.mxu0 %v754
    %893 = vmatmul.mubr.bf16.gmra.mxu0 %v753
    %v894 = vpop.f32.mrf.mxu0
    %v895 = vadd.f32 %v858, %v894
    %v896 = vpop.f32.mrf.mxu0
    %v897 = vpop.f32.mrf.mxu0
    %v898 = vpop.f32.mrf.mxu0
    %899 = vdwg.mxu0
    %900 = vmatprep.subr.bf16.mxu0 0
    %901 = vmatpush1.bf16.msra.mxu0 %v844
    %902 = vmatprep.subr.bf16.mxu0 0
    %903 = vmatpush1.bf16.msra.mxu0 %v843
    %904 = vmatprep.subr.bf16.mxu0 0
    %905 = vmatpush1.bf16.msra.mxu0 %v842
    %906 = vmatprep.subr.bf16.mxu0 0
    %907 = vmatpush1.bf16.msra.mxu0 %v841
    %908 = vmatprep.subr.bf16.mxu0 0
    %909 = vmatpush1.bf16.msra.mxu0 %v840
    %910 = vmatprep.subr.bf16.mxu0 0
    %911 = vmatpush1.bf16.msra.mxu0 %v839
    %912 = vmatprep.subr.bf16.mxu0 0
    %913 = vmatpush1.bf16.msra.mxu0 %v838
    %914 = vmatprep.subr.bf16.mxu0 0
    %915 = vmatpush1.bf16.msra.mxu0 %v837
    %916 = vmatprep.subr.bf16.mxu0 0
    %917 = vmatpush2.bf16.msra.mxu0 %v852
    %918 = vmatprep.subr.bf16.mxu0 0
    %919 = vmatpush2.bf16.msra.mxu0 %v851
    %920 = vmatprep.subr.bf16.mxu0 0
    %921 = vmatpush2.bf16.msra.mxu0 %v850
    %922 = vmatprep.subr.bf16.mxu0 0
    %923 = vmatpush2.bf16.msra.mxu0 %v849
    %924 = vmatprep.subr.bf16.mxu0 0
    %925 = vmatpush2.bf16.msra.mxu0 %v848
    %926 = vmatprep.subr.bf16.mxu0 0
    %927 = vmatpush2.bf16.msra.mxu0 %v847
    %928 = vmatprep.subr.bf16.mxu0 0
    %929 = vmatpush2.bf16.msra.mxu0 %v846
    %930 = vmatprep.subr.bf16.mxu0 0
    %931 = vmatpush2.bf16.msra.mxu0 %v845
    %932 = vmatprep.mubr.bf16.mxu0 %v756
    %933 = vmatmul.mubr.bf16.gmra.mxu0 %v755
    %v934 = vpop.f32.mrf.mxu0
    %v935 = vadd.f32 %v895, %v934
    %v936 = vpop.f32.mrf.mxu0
    %v937 = vpop.f32.mrf.mxu0
    %v938 = vpop.f32.mrf.mxu0
    %939 = vdwg.mxu0
    %v940 = vmul.f32 %v935, %v935
    %941 = vadd.xlane.f32.xlu0 %v940
    %v942 = vpop.xlane.xlu0 %941
    %v943 = vmax.f32 %v942, 1e-24
    %v944 = vrsqrt.pop %v943
    %v945 = vmul.f32 %v935, %v944
    %946 = vst [vmem:[%s8] sm:$0xff] %v945
    %v947 = vpack.c.bf16 %v945, %v945
    %948 = vst [vmem:[%s9] sm:$0x3] %v947
    %v950 = vrot.slane %v945, 4
    %v952 = vmul.f32 %v945, %v950
    %v953 = vsel %vm498, %v952, 0.0
    %954 = vadd.xlane.f32.xlu0 %v953
    %v955 = vpop.xlane.xlu0 %954
    %v956 = vmul.f32 %v955, 14.285714
    %vm957 = vcmask 3072
    %958 = vst.msk [vmem:[%s10] sm:$0xf] %vm957, %v956
    // Predicated region
    $region38: #{custom_moco_forward.2} parent=1 // pred_check
      _
    $region39: #{custom_moco_forward.2} parent=1 // pred_check_branch
      %960 = sbr.rel (0) target = $region41
    $region40: #{custom_moco_forward.2} parent=1 // pred_region
      _
    $region41: #{custom_moco_forward.2} parent=1 // pred_fallthru
      _
    // Predicated region
    $region42: #{custom_moco_forward.2} parent=1 // pred_check
      _
    $region43: #{custom_moco_forward.2} parent=1 // pred_check_branch
      %962 = sbr.rel (0) target = $region45
    $region44: #{custom_moco_forward.2} parent=1 // pred_region
      _
    $region45: #{custom_moco_forward.2} parent=1 // pred_fallthru
      _
    // Predicated region
    $region46: #{custom_moco_forward.2} parent=1 // pred_check
      _
    $region47: #{custom_moco_forward.2} parent=1 // pred_check_branch
      %964 = sbr.rel (0) target = $region49
    $region48: #{custom_moco_forward.2} parent=1 // pred_region
      _
    $region49: #{custom_moco_forward.2} parent=1 // pred_fallthru
      _
    // Predicated region
    $region50: #{custom_moco_forward.2} parent=1 // pred_check
      _
    $region51: #{custom_moco_forward.2} parent=1 // pred_check_branch
      %966 = sbr.rel (0) target = $region53
    $region52: #{custom_moco_forward.2} parent=1 // pred_region
      _
    $region53: #{custom_moco_forward.2} parent=1 // pred_fallthru
      _
    // Predicated region
    $region54: #{custom_moco_forward.2} parent=1 // pred_check
      _
    $region55: #{custom_moco_forward.2} parent=1 // pred_check_branch
      %968 = sbr.rel (0) target = $region57
    $region56: #{custom_moco_forward.2} parent=1 // pred_region
      _
    $region57: #{custom_moco_forward.2} parent=1 // pred_fallthru
      _
    // Predicated region
    $region58: #{custom_moco_forward.2} parent=1 // pred_check
      _
    $region59: #{custom_moco_forward.2} parent=1 // pred_check_branch
      %970 = sbr.rel (0) target = $region61
    $region60: #{custom_moco_forward.2} parent=1 // pred_region
      _
    $region61: #{custom_moco_forward.2} parent=1 // pred_fallthru
      _
    %971 = vsyncpa [#allocation3], 1

</llo_original>
